<compile_context>
chip_gen: v7x
topology: tpu7x:2x2x1
jax: 0.10.0
libtpu: 0.0.40
codegen_flags: <defaults>
</compile_context>

<pallas_src>
import numpy as np
import jax
import jax.numpy as jnp
from jax.experimental import pallas as pl
from jax.experimental.pallas import tpu as pltpu

# ---- module hyper-parameters (STATE_PLANES / TIME_STEPS are not defined in
# the snippet; pick small deterministic values consistent with the forward). --
STATE_PLANES = 6
TIME_STEPS = 2
C_IN = STATE_PLANES * TIME_STEPS   # 12
NUM_FILTERS = 32                   # small stand-in for the default 256
NUM_BLOCKS = 2
H, W = 4, 3                        # fixed by the heads: Linear(24*4*3, 12*4*3)
HW = H * W                         # 12
POL_C = 24
HEAD_C = 32                        # policy(24) + value(1) + zero pad(7), lane-friendly
POL_OUT = 12 * 4 * 3               # 144
EPS = 1e-5

# 3x3 conv tap offsets in flattened (row-major) position space, tap k = kh*3+kw.
PAD = 4
OFFS = tuple((kh - 1) * W + (kw - 1) for kh in range(3) for kw in range(3))


# -----------------------------------------------------------------------------
# The single fused Pallas kernel.  Every operand is a whole-array VMEM block.
# -----------------------------------------------------------------------------
def _agent_kernel(x_ref, mask_ref,
                  stem_w_ref, stem_s_ref,
                  tower_w_ref, tower_s_ref,
                  head_w_ref, head_s_ref,
                  pol_fc_w_ref, pol_fc_b_ref,
                  val_fc_w_ref, val_fc_b_ref,
                  policy_ref, value_ref,
                  pad_ref, flat_ref):
    f32 = jnp.float32
    F = NUM_FILTERS

    # Zero the padded shift scratch once; rows [0,PAD) and [PAD+HW, PAD+HW+PAD)
    # stay zero for the whole kernel, rows [PAD, PAD+HW) are rewritten per conv.
    pad_ref[...] = jnp.zeros_like(pad_ref)

    def conv3x3(inp, w_all, shift, residual=None):
        # One packed matmul for all 9 taps: Y[:, k*F:(k+1)*F] = inp @ W_k.
        y = jnp.dot(inp, w_all, preferred_element_type=f32) * mask_ref[...]  # (HW, 9F)
        pad_ref[PAD:PAD + HW, :] = y
        # Per-tap row shift = static slice of the zero-padded scratch; sum with
        # independent partial accumulators to keep the VPU pipeline full.
        taps = [pad_ref[PAD + OFFS[k]:PAD + OFFS[k] + HW, k * F:(k + 1) * F]
                for k in range(9)]
        acc = ((taps[0] + taps[1] + taps[2])
               + (taps[3] + taps[4] + taps[5])
               + (taps[6] + taps[7] + taps[8])
               + shift)
        if residual is not None:
            acc = acc + residual
        return jnp.maximum(acc, 0.0)

    # Stem: Conv3x3(+bias) -> BN -> ReLU.
    feat = conv3x3(x_ref[...], stem_w_ref[...], stem_s_ref[...])

    # Residual tower: (Conv-BN-ReLU-Conv-BN) + identity -> ReLU.
    for b in range(NUM_BLOCKS):
        h = conv3x3(feat, tower_w_ref[2 * b], tower_s_ref[2 * b])
        feat = conv3x3(h, tower_w_ref[2 * b + 1], tower_s_ref[2 * b + 1],
                       residual=feat)

    # ---- fused heads: one 1x1 conv producing 24 policy channels, 1 value
    #      channel and 7 zero columns (BN scale/shift + conv bias folded in).
    hv = jnp.maximum(
        jnp.dot(feat, head_w_ref[...], preferred_element_type=f32) + head_s_ref[...],
        0.0)                                                          # (HW, 32)

    # Policy FC: flatten (HW, 32) -> (1, HW*32) through a tiny VMEM scratch
    # (12 lane-aligned row stores), then ONE matmul against the pre-permuted,
    # zero-padded FC weight (384, 144).  Channel-major torch Flatten is baked
    # into that weight at prep time.
    for p in range(HW):
        flat_ref[0:1, p * HEAD_C:(p + 1) * HEAD_C] = hv[p:p + 1, :]
    policy = (jnp.dot(flat_ref[...], pol_fc_w_ref[...],
                      preferred_element_type=f32) + pol_fc_b_ref[...])  # (1, 144)
    policy_ref[...] = policy.astype(policy_ref.dtype)

    # Value head: column 24 of hv is ReLU(BN(Conv1x1)); Linear(12,1) done as a
    # VPU multiply + sublane reduction (no MXU), then Tanh.
    v = jnp.sum(hv[:, POL_C:POL_C + 1] * val_fc_w_ref[...],
                axis=0, keepdims=True)                                # (1, 1)
    value_ref[...] = jnp.tanh(v + val_fc_b_ref[...]).astype(value_ref.dtype)


_VMEM = pl.BlockSpec(memory_space=pltpu.MemorySpace.VMEM)


@jax.jit
def forward(x_nchw, ops):
    """x_nchw: (1, C_IN, H, W) like PyTorch.  ops: prepare_params(...) output."""
    # Single boundary transform: NCHW (batch 1) -> position-major (HW, C_IN).
    x2 = jnp.transpose(x_nchw[0], (1, 2, 0)).reshape(HW, C_IN).astype(jnp.float32)
    policy_flat, value = pl.pallas_call(
        _agent_kernel,
        out_shape=(jax.ShapeDtypeStruct((1, POL_OUT), jnp.float32),
                   jax.ShapeDtypeStruct((1, 1), jnp.float32)),
        in_specs=[_VMEM] * (1 + len(ops)),
        out_specs=(_VMEM, _VMEM),
        scratch_shapes=[
            pltpu.VMEM((HW + 2 * PAD, 9 * NUM_FILTERS), jnp.float32),  # shift pad
            pltpu.VMEM((1, HW * HEAD_C), jnp.float32),                 # flatten
        ],
    )(x2, *ops)
    return policy_flat.reshape(12, 4, 3), value


# -----------------------------------------------------------------------------
# One-time parameter preparation (BN folding, tap packing, mask, FC permute)
# -----------------------------------------------------------------------------
def bn_fold(bn, conv_bias=None):
    """Fold eval-mode BatchNorm (and optional conv bias) into scale/shift."""
    scale = bn["gamma"] / jnp.sqrt(bn["var"] + EPS)
    b = 0.0 if conv_bias is None else conv_bias
    shift = bn["beta"] + scale * (b - bn["mean"])
    return scale, shift


def _build_tap_mask():
    """(HW, 9*F) 0/1 mask: position q contributes to tap k iff the "reflected"
    output position (i_q-(kh-1), j_q-(kw-1)) is on the board."""
    m = np.zeros((HW, 9, NUM_FILTERS), np.float32)
    for kh in range(3):
        for kw in range(3):
            k = kh * 3 + kw
            for i in range(H):
                for j in range(W):
                    if 0 <= i - (kh - 1) < H and 0 <= j - (kw - 1) < W:
                        m[i * W + j, k, :] = 1.0
    return jnp.asarray(m.reshape(HW, 9 * NUM_FILTERS))


def _prep_conv3x3(w_oihw, bn, conv_bias=None):
    """Packed (Cin, 9*Cout) weight (BN scale folded), plus (1, Cout) shift."""
    c_out, c_in = w_oihw.shape[0], w_oihw.shape[1]
    scale, shift = bn_fold(bn, conv_bias)
    wt = jnp.transpose(w_oihw, (1, 2, 3, 0)) * scale[None, None, None, :]  # (ci,3,3,co)
    w_all = wt.reshape(c_in, 9 * c_out)
    return w_all.astype(jnp.float32), shift.reshape(1, c_out).astype(jnp.float32)


def prepare_params(p):
    mask = _build_tap_mask()

    stem_w, stem_s = _prep_conv3x3(p["stem_w"], p["stem_bn"], p["stem_b"])

    tower_w, tower_s = [], []
    for blk in p["blocks"]:
        w1, s1 = _prep_conv3x3(blk["w1"], blk["bn1"])
        w2, s2 = _prep_conv3x3(blk["w2"], blk["bn2"])
        tower_w += [w1, w2]
        tower_s += [s1, s2]
    tower_w = jnp.stack(tower_w)                    # (2*NUM_BLOCKS, F, 9F)
    tower_s = jnp.stack(tower_s)                    # (2*NUM_BLOCKS, 1, F)

    # Fused head 1x1 conv: [policy 24 | value 1 | zeros 7] columns, per-column
    # BN shift kept alongside (each column keeps its own shift before ReLU).
    ps, pb = bn_fold(p["pol_bn"], p["pol_conv_b"])
    pol_w = p["pol_conv_w"].reshape(POL_C, NUM_FILTERS).T * ps[None, :]   # (F, 24)
    vs, vb = bn_fold(p["val_bn"], p["val_conv_b"])
    val_w = p["val_conv_w"].reshape(1, NUM_FILTERS).T * vs[None, :]       # (F, 1)
    zpad_w = jnp.zeros((NUM_FILTERS, HEAD_C - POL_C - 1), jnp.float32)
    head_w = jnp.concatenate([pol_w, val_w, zpad_w], axis=1)              # (F, 32)
    head_s = jnp.concatenate([pb.reshape(1, POL_C), vb.reshape(1, 1),
                              jnp.zeros((1, HEAD_C - POL_C - 1), jnp.float32)],
                             axis=1)                                      # (1, 32)

    # torch Flatten is channel-major (index = c*HW + p); the kernel's flat
    # layout is position-major with 32-wide blocks (index = p*32 + c).
    wfc = p["pol_fc_w"].reshape(POL_OUT, POL_C, HW)          # (144, 24, 12)
    wfc = jnp.transpose(wfc, (2, 1, 0))                      # (12, 24, 144)
    wfc_pad = jnp.zeros((HW, HEAD_C, POL_OUT), jnp.float32).at[:, :POL_C, :].set(wfc)
    pol_fc_w = wfc_pad.reshape(HW * HEAD_C, POL_OUT)         # (384, 144)
    pol_fc_b = p["pol_fc_b"].reshape(1, POL_OUT)

    val_fc_w = p["val_fc_w"].reshape(HW, 1)                  # (12, 1)
    val_fc_b = p["val_fc_b"].reshape(1, 1)

    ops = (mask, stem_w, stem_s, tower_w, tower_s,
           head_w, head_s, pol_fc_w, pol_fc_b, val_fc_w, val_fc_b)
    return tuple(o.astype(jnp.float32) for o in ops)


# -----------------------------------------------------------------------------
# Deterministic synthetic parameters (PyTorch layouts)
# -----------------------------------------------------------------------------
def init_params(key):
    keys = iter(jax.random.split(key, 256))

    def nrm(shape, s=0.05):
        return s * jax.random.normal(next(keys), shape, jnp.float32)

    def bn(c):
        return dict(gamma=1.0 + nrm((c,)), beta=nrm((c,)),
                    mean=nrm((c,)), var=1.0 + jnp.abs(nrm((c,))))

    p = {}
    p["stem_w"] = nrm((NUM_FILTERS, C_IN, 3, 3))     # Conv2d(C_IN, F, 3) weight
    p["stem_b"] = nrm((NUM_FILTERS,))                # its bias (bias=True default)
    p["stem_bn"] = bn(NUM_FILTERS)
    p["blocks"] = []
    for _ in range(NUM_BLOCKS):
        p["blocks"].append(dict(
            w1=nrm((NUM_FILTERS, NUM_FILTERS, 3, 3)), bn1=bn(NUM_FILTERS),
            w2=nrm((NUM_FILTERS, NUM_FILTERS, 3, 3)), bn2=bn(NUM_FILTERS)))
    p["pol_conv_w"] = nrm((POL_C, NUM_FILTERS, 1, 1))
    p["pol_conv_b"] = nrm((POL_C,))
    p["pol_bn"] = bn(POL_C)
    p["pol_fc_w"] = nrm((POL_OUT, POL_C * HW))       # (144, 288), torch Linear layout
    p["pol_fc_b"] = nrm((POL_OUT,))
    p["val_conv_w"] = nrm((1, NUM_FILTERS, 1, 1))
    p["val_conv_b"] = nrm((1,))
    p["val_bn"] = bn(1)
    p["val_fc_w"] = nrm((1, HW))
    p["val_fc_b"] = nrm((1,))
    return p


# -----------------------------------------------------------------------------
# Plain-JAX eval-mode reference (mirrors AgentNetwork.forward) for validation
# -----------------------------------------------------------------------------
def reference_forward(x_nchw, p):
    with jax.default_matmul_precision("float32"):
        x_hwc = jnp.transpose(x_nchw[0], (1, 2, 0))

        def im2col(xh):
            hh, ww, c = xh.shape
            xp = jnp.pad(xh, ((1, 1), (1, 1), (0, 0)))
            cols = [xp[kh:kh + hh, kw:kw + ww, :].reshape(hh * ww, c)
                    for kh in range(3) for kw in range(3)]
            return jnp.concatenate(cols, axis=1)

        def conv_bn(xh, w, bn, bias=None, res=None):
            c_out = w.shape[0]
            patches = im2col(xh)
            w2 = jnp.transpose(w, (2, 3, 1, 0)).reshape(-1, c_out)
            scale, shift = bn_fold(bn, bias)
            y = (patches @ w2) * scale + shift
            if res is not None:
                y = y + res.reshape(-1, c_out)
            return jnp.maximum(y, 0.0).reshape(xh.shape[0], xh.shape[1], c_out)

        feat = conv_bn(x_hwc, p["stem_w"], p["stem_bn"], bias=p["stem_b"])
        for blk in p["blocks"]:
            h1 = conv_bn(feat, blk["w1"], blk["bn1"])
            feat = conv_bn(h1, blk["w2"], blk["bn2"], res=feat)

        lat = feat.reshape(HW, NUM_FILTERS)
        s, b = bn_fold(p["pol_bn"], p["pol_conv_b"])
        pol = jnp.maximum((lat @ p["pol_conv_w"].reshape(POL_C, NUM_FILTERS).T) * s + b, 0.0)
        pol_flat = jnp.transpose(pol).reshape(1, POL_C * HW)         # channel-major
        policy = (pol_flat @ p["pol_fc_w"].T + p["pol_fc_b"]).reshape(12, 4, 3)

        s, b = bn_fold(p["val_bn"], p["val_conv_b"])
        val = jnp.maximum((lat @ p["val_conv_w"].reshape(1, NUM_FILTERS).T) * s + b, 0.0)
        value = jnp.tanh(val.reshape(1, HW) @ p["val_fc_w"].T + p["val_fc_b"])
        return policy, value


if __name__ == "__main__":
    key = jax.random.PRNGKey(0)
    kp, kx = jax.random.split(key)
    params = init_params(kp)
    x = jax.random.normal(kx, (1, C_IN, H, W), jnp.float32)   # NCHW like PyTorch

    ops = prepare_params(params)
    policy, value = forward(x, ops)
    jax.block_until_ready((policy, value))

    assert policy.shape == (12, 4, 3), policy.shape
    assert value.shape == (1, 1), value.shape
    assert bool(jnp.all(jnp.isfinite(policy))) and bool(jnp.all(jnp.isfinite(value)))
    assert float(jnp.abs(value[0, 0])) <= 1.0 + 1e-6          # tanh range

    ref_policy, ref_value = reference_forward(x, params)
    pol_err = float(jnp.max(jnp.abs(policy - ref_policy)))
    val_err = float(jnp.max(jnp.abs(value - ref_value)))
    assert pol_err < 2e-2, f"policy mismatch vs reference: {pol_err}"
    assert val_err < 2e-2, f"value mismatch vs reference: {val_err}"

    print("KERNEL_OK")
</pallas_src>

<mosaic_0001>
module attributes {stable_mosaic.version = 11 : i64} {
  func.func @_agent_kernel(%arg0: memref<12x12xf32, #tpu.memory_space<vmem>>, %arg1: memref<12x288xf32, #tpu.memory_space<vmem>>, %arg2: memref<12x288xf32, #tpu.memory_space<vmem>>, %arg3: memref<1x32xf32, #tpu.memory_space<vmem>>, %arg4: memref<4x32x288xf32, #tpu.memory_space<vmem>>, %arg5: memref<4x1x32xf32, #tpu.memory_space<vmem>>, %arg6: memref<32x32xf32, #tpu.memory_space<vmem>>, %arg7: memref<1x32xf32, #tpu.memory_space<vmem>>, %arg8: memref<384x144xf32, #tpu.memory_space<vmem>>, %arg9: memref<1x144xf32, #tpu.memory_space<vmem>>, %arg10: memref<12x1xf32, #tpu.memory_space<vmem>>, %arg11: memref<1x1xf32, #tpu.memory_space<vmem>>, %arg12: memref<1x144xf32, #tpu.memory_space<vmem>>, %arg13: memref<1x1xf32, #tpu.memory_space<vmem>>, %arg14: memref<20x288xf32, #tpu.memory_space<vmem>>, %arg15: memref<1x384xf32, #tpu.memory_space<vmem>>) attributes {dimension_semantics = [], scalar_prefetch = 0 : i64, scratch_operands = 2 : i64, tpu.core_type = #tpu.core_type<tc>} {
    %cst = arith.constant 0.000000e+00 : f32
    %0 = vector.broadcast %cst : f32 to vector<20x288xf32>
    %c0 = arith.constant 0 : index
    %c0_0 = arith.constant 0 : index
    %1 = vector.load %arg14[%c0, %c0_0] : memref<20x288xf32, #tpu.memory_space<vmem>>, vector<20x288xf32>
    tpu.vector_store %arg14[%c0, %c0_0], %0 {strides = array<i32>} : memref<20x288xf32, #tpu.memory_space<vmem>>, vector<20x288xf32>,
    %c0_1 = arith.constant 0 : index
    %c0_2 = arith.constant 0 : index
    %2 = vector.load %arg0[%c0_1, %c0_2] : memref<12x12xf32, #tpu.memory_space<vmem>>, vector<12x12xf32>
    %c0_3 = arith.constant 0 : index
    %c0_4 = arith.constant 0 : index
    %3 = vector.load %arg2[%c0_3, %c0_4] : memref<12x288xf32, #tpu.memory_space<vmem>>, vector<12x288xf32>
    %c0_5 = arith.constant 0 : index
    %c0_6 = arith.constant 0 : index
    %4 = vector.load %arg3[%c0_5, %c0_6] : memref<1x32xf32, #tpu.memory_space<vmem>>, vector<1x32xf32>
    %cst_7 = arith.constant dense<0.000000e+00> : vector<12x288xf32>
    %5 = tpu.matmul %2, %3, %cst_7 {dimension_numbers = #tpu.dot_dimension_numbers<[1], [0], [0], [1], [0, 0, 1, 1], [], []>} : vector<12x12xf32>, vector<12x288xf32>, vector<12x288xf32> -> vector<12x288xf32>
    %c0_8 = arith.constant 0 : index
    %c0_9 = arith.constant 0 : index
    %6 = vector.load %arg1[%c0_8, %c0_9] : memref<12x288xf32, #tpu.memory_space<vmem>>, vector<12x288xf32>
    %7 = arith.mulf %5, %6 : vector<12x288xf32>
    %c4 = arith.constant 4 : index
    %c0_10 = arith.constant 0 : index
    %8 = vector.load %arg14[%c4, %c0_10] : memref<20x288xf32, #tpu.memory_space<vmem>>, vector<12x288xf32>
    tpu.vector_store %arg14[%c4, %c0_10], %7 {strides = array<i32>} : memref<20x288xf32, #tpu.memory_space<vmem>>, vector<12x288xf32>,
    %c0_11 = arith.constant 0 : index
    %c0_12 = arith.constant 0 : index
    %9 = vector.load %arg14[%c0_11, %c0_12] : memref<20x288xf32, #tpu.memory_space<vmem>>, vector<12x32xf32>
    %c1 = arith.constant 1 : index
    %c32 = arith.constant 32 : index
    %10 = vector.load %arg14[%c1, %c32] : memref<20x288xf32, #tpu.memory_space<vmem>>, vector<12x32xf32>
    %c2 = arith.constant 2 : index
    %c64 = arith.constant 64 : index
    %11 = vector.load %arg14[%c2, %c64] : memref<20x288xf32, #tpu.memory_space<vmem>>, vector<12x32xf32>
    %c3 = arith.constant 3 : index
    %c96 = arith.constant 96 : index
    %12 = vector.load %arg14[%c3, %c96] : memref<20x288xf32, #tpu.memory_space<vmem>>, vector<12x32xf32>
    %c4_13 = arith.constant 4 : index
    %c128 = arith.constant 128 : index
    %13 = vector.load %arg14[%c4_13, %c128] : memref<20x288xf32, #tpu.memory_space<vmem>>, vector<12x32xf32>
    %c5 = arith.constant 5 : index
    %c160 = arith.constant 160 : index
    %14 = vector.load %arg14[%c5, %c160] : memref<20x288xf32, #tpu.memory_space<vmem>>, vector<12x32xf32>
    %c6 = arith.constant 6 : index
    %c192 = arith.constant 192 : index
    %15 = vector.load %arg14[%c6, %c192] : memref<20x288xf32, #tpu.memory_space<vmem>>, vector<12x32xf32>
    %c7 = arith.constant 7 : index
    %c224 = arith.constant 224 : index
    %16 = vector.load %arg14[%c7, %c224] : memref<20x288xf32, #tpu.memory_space<vmem>>, vector<12x32xf32>
    %c8 = arith.constant 8 : index
    %c256 = arith.constant 256 : index
    %17 = vector.load %arg14[%c8, %c256] : memref<20x288xf32, #tpu.memory_space<vmem>>, vector<12x32xf32>
    %18 = arith.addf %9, %10 : vector<12x32xf32>
    %19 = arith.addf %18, %11 : vector<12x32xf32>
    %20 = arith.addf %12, %13 : vector<12x32xf32>
    %21 = arith.addf %20, %14 : vector<12x32xf32>
    %22 = arith.addf %19, %21 : vector<12x32xf32>
    %23 = arith.addf %15, %16 : vector<12x32xf32>
    %24 = arith.addf %23, %17 : vector<12x32xf32>
    %25 = arith.addf %22, %24 : vector<12x32xf32>
    %26 = vector.broadcast %4 : vector<1x32xf32> to vector<12x32xf32>
    %27 = arith.addf %25, %26 : vector<12x32xf32>
    %cst_14 = arith.constant 0.000000e+00 : f32
    %28 = vector.broadcast %cst_14 : f32 to vector<12x32xf32>
    %29 = arith.maximumf %27, %28 : vector<12x32xf32>
    %c0_15 = arith.constant 0 : index
    %c0_16 = arith.constant 0 : index
    %c0_17 = arith.constant 0 : index
    %30 = vector.load %arg4[%c0_15, %c0_16, %c0_17] : memref<4x32x288xf32, #tpu.memory_space<vmem>>, vector<1x32x288xf32>
    %31 = vector.shape_cast %30 : vector<1x32x288xf32> to vector<32x288xf32>
    %c0_18 = arith.constant 0 : index
    %c0_19 = arith.constant 0 : index
    %c0_20 = arith.constant 0 : index
    %32 = vector.load %arg5[%c0_18, %c0_19, %c0_20] : memref<4x1x32xf32, #tpu.memory_space<vmem>>, vector<1x1x32xf32>
    %33 = vector.shape_cast %32 : vector<1x1x32xf32> to vector<1x32xf32>
    %cst_21 = arith.constant dense<0.000000e+00> : vector<12x288xf32>
    %34 = tpu.matmul %29, %31, %cst_21 {dimension_numbers = #tpu.dot_dimension_numbers<[1], [0], [0], [1], [0, 0, 1, 1], [], []>} : vector<12x32xf32>, vector<32x288xf32>, vector<12x288xf32> -> vector<12x288xf32>
    %c0_22 = arith.constant 0 : index
    %c0_23 = arith.constant 0 : index
    %35 = vector.load %arg1[%c0_22, %c0_23] : memref<12x288xf32, #tpu.memory_space<vmem>>, vector<12x288xf32>
    %36 = arith.mulf %34, %35 : vector<12x288xf32>
    %c4_24 = arith.constant 4 : index
    %c0_25 = arith.constant 0 : index
    %37 = vector.load %arg14[%c4_24, %c0_25] : memref<20x288xf32, #tpu.memory_space<vmem>>, vector<12x288xf32>
    tpu.vector_store %arg14[%c4_24, %c0_25], %36 {strides = array<i32>} : memref<20x288xf32, #tpu.memory_space<vmem>>, vector<12x288xf32>,
    %c0_26 = arith.constant 0 : index
    %c0_27 = arith.constant 0 : index
    %38 = vector.load %arg14[%c0_26, %c0_27] : memref<20x288xf32, #tpu.memory_space<vmem>>, vector<12x32xf32>
    %c1_28 = arith.constant 1 : index
    %c32_29 = arith.constant 32 : index
    %39 = vector.load %arg14[%c1_28, %c32_29] : memref<20x288xf32, #tpu.memory_space<vmem>>, vector<12x32xf32>
    %c2_30 = arith.constant 2 : index
    %c64_31 = arith.constant 64 : index
    %40 = vector.load %arg14[%c2_30, %c64_31] : memref<20x288xf32, #tpu.memory_space<vmem>>, vector<12x32xf32>
    %c3_32 = arith.constant 3 : index
    %c96_33 = arith.constant 96 : index
    %41 = vector.load %arg14[%c3_32, %c96_33] : memref<20x288xf32, #tpu.memory_space<vmem>>, vector<12x32xf32>
    %c4_34 = arith.constant 4 : index
    %c128_35 = arith.constant 128 : index
    %42 = vector.load %arg14[%c4_34, %c128_35] : memref<20x288xf32, #tpu.memory_space<vmem>>, vector<12x32xf32>
    %c5_36 = arith.constant 5 : index
    %c160_37 = arith.constant 160 : index
    %43 = vector.load %arg14[%c5_36, %c160_37] : memref<20x288xf32, #tpu.memory_space<vmem>>, vector<12x32xf32>
    %c6_38 = arith.constant 6 : index
    %c192_39 = arith.constant 192 : index
    %44 = vector.load %arg14[%c6_38, %c192_39] : memref<20x288xf32, #tpu.memory_space<vmem>>, vector<12x32xf32>
    %c7_40 = arith.constant 7 : index
    %c224_41 = arith.constant 224 : index
    %45 = vector.load %arg14[%c7_40, %c224_41] : memref<20x288xf32, #tpu.memory_space<vmem>>, vector<12x32xf32>
    %c8_42 = arith.constant 8 : index
    %c256_43 = arith.constant 256 : index
    %46 = vector.load %arg14[%c8_42, %c256_43] : memref<20x288xf32, #tpu.memory_space<vmem>>, vector<12x32xf32>
    %47 = arith.addf %38, %39 : vector<12x32xf32>
    %48 = arith.addf %47, %40 : vector<12x32xf32>
    %49 = arith.addf %41, %42 : vector<12x32xf32>
    %50 = arith.addf %49, %43 : vector<12x32xf32>
    %51 = arith.addf %48, %50 : vector<12x32xf32>
    %52 = arith.addf %44, %45 : vector<12x32xf32>
    %53 = arith.addf %52, %46 : vector<12x32xf32>
    %54 = arith.addf %51, %53 : vector<12x32xf32>
    %55 = vector.broadcast %33 : vector<1x32xf32> to vector<12x32xf32>
    %56 = arith.addf %54, %55 : vector<12x32xf32>
    %cst_44 = arith.constant 0.000000e+00 : f32
    %57 = vector.broadcast %cst_44 : f32 to vector<12x32xf32>
    %58 = arith.maximumf %56, %57 : vector<12x32xf32>
    %c1_45 = arith.constant 1 : index
    %c0_46 = arith.constant 0 : index
    %c0_47 = arith.constant 0 : index
    %59 = vector.load %arg4[%c1_45, %c0_46, %c0_47] : memref<4x32x288xf32, #tpu.memory_space<vmem>>, vector<1x32x288xf32>
    %60 = vector.shape_cast %59 : vector<1x32x288xf32> to vector<32x288xf32>
    %c1_48 = arith.constant 1 : index
    %c0_49 = arith.constant 0 : index
    %c0_50 = arith.constant 0 : index
    %61 = vector.load %arg5[%c1_48, %c0_49, %c0_50] : memref<4x1x32xf32, #tpu.memory_space<vmem>>, vector<1x1x32xf32>
    %62 = vector.shape_cast %61 : vector<1x1x32xf32> to vector<1x32xf32>
    %cst_51 = arith.constant dense<0.000000e+00> : vector<12x288xf32>
    %63 = tpu.matmul %58, %60, %cst_51 {dimension_numbers = #tpu.dot_dimension_numbers<[1], [0], [0], [1], [0, 0, 1, 1], [], []>} : vector<12x32xf32>, vector<32x288xf32>, vector<12x288xf32> -> vector<12x288xf32>
    %c0_52 = arith.constant 0 : index
    %c0_53 = arith.constant 0 : index
    %64 = vector.load %arg1[%c0_52, %c0_53] : memref<12x288xf32, #tpu.memory_space<vmem>>, vector<12x288xf32>
    %65 = arith.mulf %63, %64 : vector<12x288xf32>
    %c4_54 = arith.constant 4 : index
    %c0_55 = arith.constant 0 : index
    %66 = vector.load %arg14[%c4_54, %c0_55] : memref<20x288xf32, #tpu.memory_space<vmem>>, vector<12x288xf32>
    tpu.vector_store %arg14[%c4_54, %c0_55], %65 {strides = array<i32>} : memref<20x288xf32, #tpu.memory_space<vmem>>, vector<12x288xf32>,
    %c0_56 = arith.constant 0 : index
    %c0_57 = arith.constant 0 : index
    %67 = vector.load %arg14[%c0_56, %c0_57] : memref<20x288xf32, #tpu.memory_space<vmem>>, vector<12x32xf32>
    %c1_58 = arith.constant 1 : index
    %c32_59 = arith.constant 32 : index
    %68 = vector.load %arg14[%c1_58, %c32_59] : memref<20x288xf32, #tpu.memory_space<vmem>>, vector<12x32xf32>
    %c2_60 = arith.constant 2 : index
    %c64_61 = arith.constant 64 : index
    %69 = vector.load %arg14[%c2_60, %c64_61] : memref<20x288xf32, #tpu.memory_space<vmem>>, vector<12x32xf32>
    %c3_62 = arith.constant 3 : index
    %c96_63 = arith.constant 96 : index
    %70 = vector.load %arg14[%c3_62, %c96_63] : memref<20x288xf32, #tpu.memory_space<vmem>>, vector<12x32xf32>
    %c4_64 = arith.constant 4 : index
    %c128_65 = arith.constant 128 : index
    %71 = vector.load %arg14[%c4_64, %c128_65] : memref<20x288xf32, #tpu.memory_space<vmem>>, vector<12x32xf32>
    %c5_66 = arith.constant 5 : index
    %c160_67 = arith.constant 160 : index
    %72 = vector.load %arg14[%c5_66, %c160_67] : memref<20x288xf32, #tpu.memory_space<vmem>>, vector<12x32xf32>
    %c6_68 = arith.constant 6 : index
    %c192_69 = arith.constant 192 : index
    %73 = vector.load %arg14[%c6_68, %c192_69] : memref<20x288xf32, #tpu.memory_space<vmem>>, vector<12x32xf32>
    %c7_70 = arith.constant 7 : index
    %c224_71 = arith.constant 224 : index
    %74 = vector.load %arg14[%c7_70, %c224_71] : memref<20x288xf32, #tpu.memory_space<vmem>>, vector<12x32xf32>
    %c8_72 = arith.constant 8 : index
    %c256_73 = arith.constant 256 : index
    %75 = vector.load %arg14[%c8_72, %c256_73] : memref<20x288xf32, #tpu.memory_space<vmem>>, vector<12x32xf32>
    %76 = arith.addf %67, %68 : vector<12x32xf32>
    %77 = arith.addf %76, %69 : vector<12x32xf32>
    %78 = arith.addf %70, %71 : vector<12x32xf32>
    %79 = arith.addf %78, %72 : vector<12x32xf32>
    %80 = arith.addf %77, %79 : vector<12x32xf32>
    %81 = arith.addf %73, %74 : vector<12x32xf32>
    %82 = arith.addf %81, %75 : vector<12x32xf32>
    %83 = arith.addf %80, %82 : vector<12x32xf32>
    %84 = vector.broadcast %62 : vector<1x32xf32> to vector<12x32xf32>
    %85 = arith.addf %83, %84 : vector<12x32xf32>
    %86 = arith.addf %85, %29 : vector<12x32xf32>
    %cst_74 = arith.constant 0.000000e+00 : f32
    %87 = vector.broadcast %cst_74 : f32 to vector<12x32xf32>
    %88 = arith.maximumf %86, %87 : vector<12x32xf32>
    %c2_75 = arith.constant 2 : index
    %c0_76 = arith.constant 0 : index
    %c0_77 = arith.constant 0 : index
    %89 = vector.load %arg4[%c2_75, %c0_76, %c0_77] : memref<4x32x288xf32, #tpu.memory_space<vmem>>, vector<1x32x288xf32>
    %90 = vector.shape_cast %89 : vector<1x32x288xf32> to vector<32x288xf32>
    %c2_78 = arith.constant 2 : index
    %c0_79 = arith.constant 0 : index
    %c0_80 = arith.constant 0 : index
    %91 = vector.load %arg5[%c2_78, %c0_79, %c0_80] : memref<4x1x32xf32, #tpu.memory_space<vmem>>, vector<1x1x32xf32>
    %92 = vector.shape_cast %91 : vector<1x1x32xf32> to vector<1x32xf32>
    %cst_81 = arith.constant dense<0.000000e+00> : vector<12x288xf32>
    %93 = tpu.matmul %88, %90, %cst_81 {dimension_numbers = #tpu.dot_dimension_numbers<[1], [0], [0], [1], [0, 0, 1, 1], [], []>} : vector<12x32xf32>, vector<32x288xf32>, vector<12x288xf32> -> vector<12x288xf32>
    %c0_82 = arith.constant 0 : index
    %c0_83 = arith.constant 0 : index
    %94 = vector.load %arg1[%c0_82, %c0_83] : memref<12x288xf32, #tpu.memory_space<vmem>>, vector<12x288xf32>
    %95 = arith.mulf %93, %94 : vector<12x288xf32>
    %c4_84 = arith.constant 4 : index
    %c0_85 = arith.constant 0 : index
    %96 = vector.load %arg14[%c4_84, %c0_85] : memref<20x288xf32, #tpu.memory_space<vmem>>, vector<12x288xf32>
    tpu.vector_store %arg14[%c4_84, %c0_85], %95 {strides = array<i32>} : memref<20x288xf32, #tpu.memory_space<vmem>>, vector<12x288xf32>,
    %c0_86 = arith.constant 0 : index
    %c0_87 = arith.constant 0 : index
    %97 = vector.load %arg14[%c0_86, %c0_87] : memref<20x288xf32, #tpu.memory_space<vmem>>, vector<12x32xf32>
    %c1_88 = arith.constant 1 : index
    %c32_89 = arith.constant 32 : index
    %98 = vector.load %arg14[%c1_88, %c32_89] : memref<20x288xf32, #tpu.memory_space<vmem>>, vector<12x32xf32>
    %c2_90 = arith.constant 2 : index
    %c64_91 = arith.constant 64 : index
    %99 = vector.load %arg14[%c2_90, %c64_91] : memref<20x288xf32, #tpu.memory_space<vmem>>, vector<12x32xf32>
    %c3_92 = arith.constant 3 : index
    %c96_93 = arith.constant 96 : index
    %100 = vector.load %arg14[%c3_92, %c96_93] : memref<20x288xf32, #tpu.memory_space<vmem>>, vector<12x32xf32>
    %c4_94 = arith.constant 4 : index
    %c128_95 = arith.constant 128 : index
    %101 = vector.load %arg14[%c4_94, %c128_95] : memref<20x288xf32, #tpu.memory_space<vmem>>, vector<12x32xf32>
    %c5_96 = arith.constant 5 : index
    %c160_97 = arith.constant 160 : index
    %102 = vector.load %arg14[%c5_96, %c160_97] : memref<20x288xf32, #tpu.memory_space<vmem>>, vector<12x32xf32>
    %c6_98 = arith.constant 6 : index
    %c192_99 = arith.constant 192 : index
    %103 = vector.load %arg14[%c6_98, %c192_99] : memref<20x288xf32, #tpu.memory_space<vmem>>, vector<12x32xf32>
    %c7_100 = arith.constant 7 : index
    %c224_101 = arith.constant 224 : index
    %104 = vector.load %arg14[%c7_100, %c224_101] : memref<20x288xf32, #tpu.memory_space<vmem>>, vector<12x32xf32>
    %c8_102 = arith.constant 8 : index
    %c256_103 = arith.constant 256 : index
    %105 = vector.load %arg14[%c8_102, %c256_103] : memref<20x288xf32, #tpu.memory_space<vmem>>, vector<12x32xf32>
    %106 = arith.addf %97, %98 : vector<12x32xf32>
    %107 = arith.addf %106, %99 : vector<12x32xf32>
    %108 = arith.addf %100, %101 : vector<12x32xf32>
    %109 = arith.addf %108, %102 : vector<12x32xf32>
    %110 = arith.addf %107, %109 : vector<12x32xf32>
    %111 = arith.addf %103, %104 : vector<12x32xf32>
    %112 = arith.addf %111, %105 : vector<12x32xf32>
    %113 = arith.addf %110, %112 : vector<12x32xf32>
    %114 = vector.broadcast %92 : vector<1x32xf32> to vector<12x32xf32>
    %115 = arith.addf %113, %114 : vector<12x32xf32>
    %cst_104 = arith.constant 0.000000e+00 : f32
    %116 = vector.broadcast %cst_104 : f32 to vector<12x32xf32>
    %117 = arith.maximumf %115, %116 : vector<12x32xf32>
    %c3_105 = arith.constant 3 : index
    %c0_106 = arith.constant 0 : index
    %c0_107 = arith.constant 0 : index
    %118 = vector.load %arg4[%c3_105, %c0_106, %c0_107] : memref<4x32x288xf32, #tpu.memory_space<vmem>>, vector<1x32x288xf32>
    %119 = vector.shape_cast %118 : vector<1x32x288xf32> to vector<32x288xf32>
    %c3_108 = arith.constant 3 : index
    %c0_109 = arith.constant 0 : index
    %c0_110 = arith.constant 0 : index
    %120 = vector.load %arg5[%c3_108, %c0_109, %c0_110] : memref<4x1x32xf32, #tpu.memory_space<vmem>>, vector<1x1x32xf32>
    %121 = vector.shape_cast %120 : vector<1x1x32xf32> to vector<1x32xf32>
    %cst_111 = arith.constant dense<0.000000e+00> : vector<12x288xf32>
    %122 = tpu.matmul %117, %119, %cst_111 {dimension_numbers = #tpu.dot_dimension_numbers<[1], [0], [0], [1], [0, 0, 1, 1], [], []>} : vector<12x32xf32>, vector<32x288xf32>, vector<12x288xf32> -> vector<12x288xf32>
    %c0_112 = arith.constant 0 : index
    %c0_113 = arith.constant 0 : index
    %123 = vector.load %arg1[%c0_112, %c0_113] : memref<12x288xf32, #tpu.memory_space<vmem>>, vector<12x288xf32>
    %124 = arith.mulf %122, %123 : vector<12x288xf32>
    %c4_114 = arith.constant 4 : index
    %c0_115 = arith.constant 0 : index
    %125 = vector.load %arg14[%c4_114, %c0_115] : memref<20x288xf32, #tpu.memory_space<vmem>>, vector<12x288xf32>
    tpu.vector_store %arg14[%c4_114, %c0_115], %124 {strides = array<i32>} : memref<20x288xf32, #tpu.memory_space<vmem>>, vector<12x288xf32>,
    %c0_116 = arith.constant 0 : index
    %c0_117 = arith.constant 0 : index
    %126 = vector.load %arg14[%c0_116, %c0_117] : memref<20x288xf32, #tpu.memory_space<vmem>>, vector<12x32xf32>
    %c1_118 = arith.constant 1 : index
    %c32_119 = arith.constant 32 : index
    %127 = vector.load %arg14[%c1_118, %c32_119] : memref<20x288xf32, #tpu.memory_space<vmem>>, vector<12x32xf32>
    %c2_120 = arith.constant 2 : index
    %c64_121 = arith.constant 64 : index
    %128 = vector.load %arg14[%c2_120, %c64_121] : memref<20x288xf32, #tpu.memory_space<vmem>>, vector<12x32xf32>
    %c3_122 = arith.constant 3 : index
    %c96_123 = arith.constant 96 : index
    %129 = vector.load %arg14[%c3_122, %c96_123] : memref<20x288xf32, #tpu.memory_space<vmem>>, vector<12x32xf32>
    %c4_124 = arith.constant 4 : index
    %c128_125 = arith.constant 128 : index
    %130 = vector.load %arg14[%c4_124, %c128_125] : memref<20x288xf32, #tpu.memory_space<vmem>>, vector<12x32xf32>
    %c5_126 = arith.constant 5 : index
    %c160_127 = arith.constant 160 : index
    %131 = vector.load %arg14[%c5_126, %c160_127] : memref<20x288xf32, #tpu.memory_space<vmem>>, vector<12x32xf32>
    %c6_128 = arith.constant 6 : index
    %c192_129 = arith.constant 192 : index
    %132 = vector.load %arg14[%c6_128, %c192_129] : memref<20x288xf32, #tpu.memory_space<vmem>>, vector<12x32xf32>
    %c7_130 = arith.constant 7 : index
    %c224_131 = arith.constant 224 : index
    %133 = vector.load %arg14[%c7_130, %c224_131] : memref<20x288xf32, #tpu.memory_space<vmem>>, vector<12x32xf32>
    %c8_132 = arith.constant 8 : index
    %c256_133 = arith.constant 256 : index
    %134 = vector.load %arg14[%c8_132, %c256_133] : memref<20x288xf32, #tpu.memory_space<vmem>>, vector<12x32xf32>
    %135 = arith.addf %126, %127 : vector<12x32xf32>
    %136 = arith.addf %135, %128 : vector<12x32xf32>
    %137 = arith.addf %129, %130 : vector<12x32xf32>
    %138 = arith.addf %137, %131 : vector<12x32xf32>
    %139 = arith.addf %136, %138 : vector<12x32xf32>
    %140 = arith.addf %132, %133 : vector<12x32xf32>
    %141 = arith.addf %140, %134 : vector<12x32xf32>
    %142 = arith.addf %139, %141 : vector<12x32xf32>
    %143 = vector.broadcast %121 : vector<1x32xf32> to vector<12x32xf32>
    %144 = arith.addf %142, %143 : vector<12x32xf32>
    %145 = arith.addf %144, %88 : vector<12x32xf32>
    %cst_134 = arith.constant 0.000000e+00 : f32
    %146 = vector.broadcast %cst_134 : f32 to vector<12x32xf32>
    %147 = arith.maximumf %145, %146 : vector<12x32xf32>
    %c0_135 = arith.constant 0 : index
    %c0_136 = arith.constant 0 : index
    %148 = vector.load %arg6[%c0_135, %c0_136] : memref<32x32xf32, #tpu.memory_space<vmem>>, vector<32x32xf32>
    %cst_137 = arith.constant dense<0.000000e+00> : vector<12x32xf32>
    %149 = tpu.matmul %147, %148, %cst_137 {dimension_numbers = #tpu.dot_dimension_numbers<[1], [0], [0], [1], [0, 0, 1, 1], [], []>} : vector<12x32xf32>, vector<32x32xf32>, vector<12x32xf32> -> vector<12x32xf32>
    %c0_138 = arith.constant 0 : index
    %c0_139 = arith.constant 0 : index
    %150 = vector.load %arg7[%c0_138, %c0_139] : memref<1x32xf32, #tpu.memory_space<vmem>>, vector<1x32xf32>
    %151 = vector.broadcast %150 : vector<1x32xf32> to vector<12x32xf32>
    %152 = arith.addf %149, %151 : vector<12x32xf32>
    %cst_140 = arith.constant 0.000000e+00 : f32
    %153 = vector.broadcast %cst_140 : f32 to vector<12x32xf32>
    %154 = arith.maximumf %152, %153 : vector<12x32xf32>
    %155 = vector.extract_strided_slice %154 {offsets = [0, 0], sizes = [1, 32], strides = [1, 1]} : vector<12x32xf32> to vector<1x32xf32>
    %c0_141 = arith.constant 0 : index
    %c0_142 = arith.constant 0 : index
    %156 = vector.load %arg15[%c0_141, %c0_142] : memref<1x384xf32, #tpu.memory_space<vmem>>, vector<1x32xf32>
    tpu.vector_store %arg15[%c0_141, %c0_142], %155 {strides = array<i32>} : memref<1x384xf32, #tpu.memory_space<vmem>>, vector<1x32xf32>,
    %157 = vector.extract_strided_slice %154 {offsets = [1, 0], sizes = [1, 32], strides = [1, 1]} : vector<12x32xf32> to vector<1x32xf32>
    %c0_143 = arith.constant 0 : index
    %c32_144 = arith.constant 32 : index
    %158 = vector.load %arg15[%c0_143, %c32_144] : memref<1x384xf32, #tpu.memory_space<vmem>>, vector<1x32xf32>
    tpu.vector_store %arg15[%c0_143, %c32_144], %157 {strides = array<i32>} : memref<1x384xf32, #tpu.memory_space<vmem>>, vector<1x32xf32>,
    %159 = vector.extract_strided_slice %154 {offsets = [2, 0], sizes = [1, 32], strides = [1, 1]} : vector<12x32xf32> to vector<1x32xf32>
    %c0_145 = arith.constant 0 : index
    %c64_146 = arith.constant 64 : index
    %160 = vector.load %arg15[%c0_145, %c64_146] : memref<1x384xf32, #tpu.memory_space<vmem>>, vector<1x32xf32>
    tpu.vector_store %arg15[%c0_145, %c64_146], %159 {strides = array<i32>} : memref<1x384xf32, #tpu.memory_space<vmem>>, vector<1x32xf32>,
    %161 = vector.extract_strided_slice %154 {offsets = [3, 0], sizes = [1, 32], strides = [1, 1]} : vector<12x32xf32> to vector<1x32xf32>
    %c0_147 = arith.constant 0 : index
    %c96_148 = arith.constant 96 : index
    %162 = vector.load %arg15[%c0_147, %c96_148] : memref<1x384xf32, #tpu.memory_space<vmem>>, vector<1x32xf32>
    tpu.vector_store %arg15[%c0_147, %c96_148], %161 {strides = array<i32>} : memref<1x384xf32, #tpu.memory_space<vmem>>, vector<1x32xf32>,
    %163 = vector.extract_strided_slice %154 {offsets = [4, 0], sizes = [1, 32], strides = [1, 1]} : vector<12x32xf32> to vector<1x32xf32>
    %c0_149 = arith.constant 0 : index
    %c128_150 = arith.constant 128 : index
    %164 = vector.load %arg15[%c0_149, %c128_150] : memref<1x384xf32, #tpu.memory_space<vmem>>, vector<1x32xf32>
    tpu.vector_store %arg15[%c0_149, %c128_150], %163 {strides = array<i32>} : memref<1x384xf32, #tpu.memory_space<vmem>>, vector<1x32xf32>,
    %165 = vector.extract_strided_slice %154 {offsets = [5, 0], sizes = [1, 32], strides = [1, 1]} : vector<12x32xf32> to vector<1x32xf32>
    %c0_151 = arith.constant 0 : index
    %c160_152 = arith.constant 160 : index
    %166 = vector.load %arg15[%c0_151, %c160_152] : memref<1x384xf32, #tpu.memory_space<vmem>>, vector<1x32xf32>
    tpu.vector_store %arg15[%c0_151, %c160_152], %165 {strides = array<i32>} : memref<1x384xf32, #tpu.memory_space<vmem>>, vector<1x32xf32>,
    %167 = vector.extract_strided_slice %154 {offsets = [6, 0], sizes = [1, 32], strides = [1, 1]} : vector<12x32xf32> to vector<1x32xf32>
    %c0_153 = arith.constant 0 : index
    %c192_154 = arith.constant 192 : index
    %168 = vector.load %arg15[%c0_153, %c192_154] : memref<1x384xf32, #tpu.memory_space<vmem>>, vector<1x32xf32>
    tpu.vector_store %arg15[%c0_153, %c192_154], %167 {strides = array<i32>} : memref<1x384xf32, #tpu.memory_space<vmem>>, vector<1x32xf32>,
    %169 = vector.extract_strided_slice %154 {offsets = [7, 0], sizes = [1, 32], strides = [1, 1]} : vector<12x32xf32> to vector<1x32xf32>
    %c0_155 = arith.constant 0 : index
    %c224_156 = arith.constant 224 : index
    %170 = vector.load %arg15[%c0_155, %c224_156] : memref<1x384xf32, #tpu.memory_space<vmem>>, vector<1x32xf32>
    tpu.vector_store %arg15[%c0_155, %c224_156], %169 {strides = array<i32>} : memref<1x384xf32, #tpu.memory_space<vmem>>, vector<1x32xf32>,
    %171 = vector.extract_strided_slice %154 {offsets = [8, 0], sizes = [1, 32], strides = [1, 1]} : vector<12x32xf32> to vector<1x32xf32>
    %c0_157 = arith.constant 0 : index
    %c256_158 = arith.constant 256 : index
    %172 = vector.load %arg15[%c0_157, %c256_158] : memref<1x384xf32, #tpu.memory_space<vmem>>, vector<1x32xf32>
    tpu.vector_store %arg15[%c0_157, %c256_158], %171 {strides = array<i32>} : memref<1x384xf32, #tpu.memory_space<vmem>>, vector<1x32xf32>,
    %173 = vector.extract_strided_slice %154 {offsets = [9, 0], sizes = [1, 32], strides = [1, 1]} : vector<12x32xf32> to vector<1x32xf32>
    %c0_159 = arith.constant 0 : index
    %c288 = arith.constant 288 : index
    %174 = vector.load %arg15[%c0_159, %c288] : memref<1x384xf32, #tpu.memory_space<vmem>>, vector<1x32xf32>
    tpu.vector_store %arg15[%c0_159, %c288], %173 {strides = array<i32>} : memref<1x384xf32, #tpu.memory_space<vmem>>, vector<1x32xf32>,
    %175 = vector.extract_strided_slice %154 {offsets = [10, 0], sizes = [1, 32], strides = [1, 1]} : vector<12x32xf32> to vector<1x32xf32>
    %c0_160 = arith.constant 0 : index
    %c320 = arith.constant 320 : index
    %176 = vector.load %arg15[%c0_160, %c320] : memref<1x384xf32, #tpu.memory_space<vmem>>, vector<1x32xf32>
    tpu.vector_store %arg15[%c0_160, %c320], %175 {strides = array<i32>} : memref<1x384xf32, #tpu.memory_space<vmem>>, vector<1x32xf32>,
    %177 = vector.extract_strided_slice %154 {offsets = [11, 0], sizes = [1, 32], strides = [1, 1]} : vector<12x32xf32> to vector<1x32xf32>
    %c0_161 = arith.constant 0 : index
    %c352 = arith.constant 352 : index
    %178 = vector.load %arg15[%c0_161, %c352] : memref<1x384xf32, #tpu.memory_space<vmem>>, vector<1x32xf32>
    tpu.vector_store %arg15[%c0_161, %c352], %177 {strides = array<i32>} : memref<1x384xf32, #tpu.memory_space<vmem>>, vector<1x32xf32>,
    %c0_162 = arith.constant 0 : index
    %c0_163 = arith.constant 0 : index
    %179 = vector.load %arg15[%c0_162, %c0_163] : memref<1x384xf32, #tpu.memory_space<vmem>>, vector<1x384xf32>
    %c0_164 = arith.constant 0 : index
    %c0_165 = arith.constant 0 : index
    %180 = vector.load %arg8[%c0_164, %c0_165] : memref<384x144xf32, #tpu.memory_space<vmem>>, vector<384x144xf32>
    %cst_166 = arith.constant dense<0.000000e+00> : vector<1x144xf32>
    %181 = tpu.matmul %179, %180, %cst_166 {dimension_numbers = #tpu.dot_dimension_numbers<[1], [0], [0], [1], [0, 0, 1, 1], [], []>} : vector<1x384xf32>, vector<384x144xf32>, vector<1x144xf32> -> vector<1x144xf32>
    %c0_167 = arith.constant 0 : index
    %c0_168 = arith.constant 0 : index
    %182 = vector.load %arg9[%c0_167, %c0_168] : memref<1x144xf32, #tpu.memory_space<vmem>>, vector<1x144xf32>
    %183 = arith.addf %181, %182 : vector<1x144xf32>
    %c0_169 = arith.constant 0 : index
    %c0_170 = arith.constant 0 : index
    %184 = vector.load %arg12[%c0_169, %c0_170] : memref<1x144xf32, #tpu.memory_space<vmem>>, vector<1x144xf32>
    tpu.vector_store %arg12[%c0_169, %c0_170], %183 {strides = array<i32>} : memref<1x144xf32, #tpu.memory_space<vmem>>, vector<1x144xf32>,
    %185 = vector.extract_strided_slice %154 {offsets = [0, 24], sizes = [12, 1], strides = [1, 1]} : vector<12x32xf32> to vector<12x1xf32>
    %c0_171 = arith.constant 0 : index
    %c0_172 = arith.constant 0 : index
    %186 = vector.load %arg10[%c0_171, %c0_172] : memref<12x1xf32, #tpu.memory_space<vmem>>, vector<12x1xf32>
    %187 = arith.mulf %185, %186 : vector<12x1xf32>
    %cst_173 = arith.constant dense<0.000000e+00> : vector<1xf32>
    %188 = vector.multi_reduction <add>, %187, %cst_173 [0] : vector<12x1xf32> to vector<1xf32>
    %189 = vector.shape_cast %188 : vector<1xf32> to vector<1x1xf32>
    %c0_174 = arith.constant 0 : index
    %c0_175 = arith.constant 0 : index
    %190 = vector.load %arg11[%c0_174, %c0_175] : memref<1x1xf32, #tpu.memory_space<vmem>>, vector<1x1xf32>
    %191 = arith.addf %189, %190 : vector<1x1xf32>
    %192 = math.tanh %191 : vector<1x1xf32>
    %c0_176 = arith.constant 0 : index
    %c0_177 = arith.constant 0 : index
    %193 = vector.load %arg13[%c0_176, %c0_177] : memref<1x1xf32, #tpu.memory_space<vmem>>, vector<1x1xf32>
    tpu.vector_store %arg13[%c0_176, %c0_177], %192 {strides = array<i32>} : memref<1x1xf32, #tpu.memory_space<vmem>>, vector<1x1xf32>,
    return
  }
}

</mosaic_0001>

<llo_original>
// kernel: forward.1
$region0: #{forward.1}
  #allocation0 [shape = 'u32[]', space=smem, size = 0x4, offset = 0x4, fixed_abs, tag = 'smem constant byte address 0x4 - core index']
  #allocation1 [shape = 'u32[144,128]{1,0:T(1,128)}', space=vmem, size = 0x12000, scoped, tag = 'internal scratch']
  #allocation2 [shape = 'f32[20,288]{1,0:T(8,128)}', space=vmem, size = 0x9000, scoped, tag = 'scratch operand']
  #allocation3 [shape = 'f32[1,384]{1,0:T(1,128)}', space=vmem, size = 0x600, scoped, tag = 'scratch operand']
  #allocation4 [shape = 'f32[1,1]{1,0:T(1,128)S(1)}', space=vmem, size = 0x200, scoped, tag = 'scoped memory for forward.1']
  %s0 = inlined_call_operand.vmem [shape: f32[12,12], index: 0, kind: input, shape index: {}]
  %s1 = inlined_call_operand.vmem [shape: f32[12,288], index: 1, kind: input, shape index: {}]
  %s2 = inlined_call_operand.vmem [shape: f32[12,288], index: 2, kind: input, shape index: {}]
  %s3 = inlined_call_operand.vmem [shape: f32[1,32], index: 3, kind: input, shape index: {}]
  %s4 = inlined_call_operand.vmem [shape: f32[4,32,288], index: 4, kind: input, shape index: {}]
  %s5 = inlined_call_operand.vmem [shape: f32[4,1,32], index: 5, kind: input, shape index: {}]
  %s6 = inlined_call_operand.vmem [shape: f32[32,32], index: 6, kind: input, shape index: {}]
  %s7 = inlined_call_operand.vmem [shape: f32[1,32], index: 7, kind: input, shape index: {}]
  %s8 = inlined_call_operand.vmem [shape: f32[384,144], index: 8, kind: input, shape index: {}]
  %s9 = inlined_call_operand.vmem [shape: f32[1,144], index: 9, kind: input, shape index: {}]
  %s10 = inlined_call_operand.vmem [shape: f32[12,1], index: 10, kind: input, shape index: {}]
  %s11 = inlined_call_operand.<no memory space> [shape: f32[1,1], index: 11, kind: input, shape index: {}]
  %s12 = inlined_call_operand.vmem [shape: f32[1,144], index: 12, kind: output, shape index: {0}]
  %s13 = inlined_call_operand.hbm [shape: f32[1,1], index: 13, kind: output, shape index: {1}]
  %14 = xla_tuple %s12, %s13
  %s15 = sld [smem:[#allocation0]]
  $region66: #{forward.1} parent=0
    _
  %s17 = ssub.s32 1, %s15
  %s18 = scalar_select 0, %s17, %s15
  %v19 = vstv %s11
  %20 = vst [vmem:[#allocation4] sm:$0x1] %v19
  $region1: #{forward.1} parent=0
    #allocation5 [shape = 'u8[512]{0}', space=vmem, size = 0x400, scoped, tag = 'output window, operand 1, single buffered']
    #allocation6 [shape = 's32[1]{0}', space=sflag, size = 0x4, scoped, tag = 'scoped memory for forward.1']
    %21 = vsyncpa [#allocation6], 0
    // Predicated region
    $region2: #{forward.1} parent=1 // pred_check
      _
    $region3: #{forward.1} parent=1 // pred_check_branch
      %23 = sbr.rel (0) target = $region5
    $region4: #{forward.1} parent=1 // pred_region
      _
    $region5: #{forward.1} parent=1 // pred_fallthru
      _
    // Predicated region
    $region6: #{forward.1} parent=1 // pred_check
      _
    $region7: #{forward.1} parent=1 // pred_check_branch
      %25 = sbr.rel (0) target = $region9
    $region8: #{forward.1} parent=1 // pred_region
      _
    $region9: #{forward.1} parent=1 // pred_fallthru
      _
    // Predicated region
    $region10: #{forward.1} parent=1 // pred_check
      _
    $region11: #{forward.1} parent=1 // pred_check_branch
      %27 = sbr.rel (0) target = $region13
    $region12: #{forward.1} parent=1 // pred_region
      _
    $region13: #{forward.1} parent=1 // pred_fallthru
      _
    // Predicated region
    $region14: #{forward.1} parent=1 // pred_check
      _
    $region15: #{forward.1} parent=1 // pred_check_branch
      %29 = sbr.rel (0) target = $region17
    $region16: #{forward.1} parent=1 // pred_region
      _
    $region17: #{forward.1} parent=1 // pred_fallthru
      _
    // Predicated region
    $region18: #{forward.1} parent=1 // pred_check
      _
    $region19: #{forward.1} parent=1 // pred_check_branch
      %31 = sbr.rel (0) target = $region21
    $region20: #{forward.1} parent=1 // pred_region
      _
    $region21: #{forward.1} parent=1 // pred_fallthru
      _
    // Predicated region
    $region22: #{forward.1} parent=1 // pred_check
      _
    $region23: #{forward.1} parent=1 // pred_check_branch
      %33 = sbr.rel (0) target = $region25
    $region24: #{forward.1} parent=1 // pred_region
      _
    $region25: #{forward.1} parent=1 // pred_fallthru
      _
    // Predicated region
    $region26: #{forward.1} parent=1 // pred_check
      _
    $region27: #{forward.1} parent=1 // pred_check_branch
      %35 = sbr.rel (0) target = $region29
    $region28: #{forward.1} parent=1 // pred_region
      _
    $region29: #{forward.1} parent=1 // pred_fallthru
      _
    // Predicated region
    $region30: #{forward.1} parent=1 // pred_check
      _
    $region31: #{forward.1} parent=1 // pred_check_branch
      %37 = sbr.rel (0) target = $region33
    $region32: #{forward.1} parent=1 // pred_region
      _
    $region33: #{forward.1} parent=1 // pred_fallthru
      _
    // Predicated region
    $region34: #{forward.1} parent=1 // pred_check
      _
    $region35: #{forward.1} parent=1 // pred_check_branch
      %39 = sbr.rel (0) target = $region37
    $region36: #{forward.1} parent=1 // pred_region
      _
    $region37: #{forward.1} parent=1 // pred_fallthru
      _
    // Predicated region
    $region38: #{forward.1} parent=1 // pred_check
      _
    $region39: #{forward.1} parent=1 // pred_check_branch
      %41 = sbr.rel (0) target = $region41
    $region40: #{forward.1} parent=1 // pred_region
      _
    $region41: #{forward.1} parent=1 // pred_fallthru
      _
    // Predicated region
    $region42: #{forward.1} parent=1 // pred_check
      _
    $region43: #{forward.1} parent=1 // pred_check_branch
      %43 = sbr.rel (0) target = $region45
    $region44: #{forward.1} parent=1 // pred_region
      _
    $region45: #{forward.1} parent=1 // pred_fallthru
      _
    // Predicated region
    $region46: #{forward.1} parent=1 // pred_check
      _
    $region47: #{forward.1} parent=1 // pred_check_branch
      %45 = sbr.rel (0) target = $region49
    $region48: #{forward.1} parent=1 // pred_region
      _
    $region49: #{forward.1} parent=1 // pred_fallthru
      _
    %46 = vst [vmem:[#allocation2] sm:$0xff] 0.0
    %47 = vst [vmem:[#allocation2 + $0x8] sm:$0xff] 0.0
    %vm48 = vcmask 261120
    %49 = vst.msk [vmem:[#allocation2 + $0x10] sm:$0xff] %vm48, 0.0
    %50 = vst [vmem:[#allocation2 + $0x18] sm:$0xff] 0.0
    %51 = vst [vmem:[#allocation2 + $0x20] sm:$0xff] 0.0
    %52 = vst.msk [vmem:[#allocation2 + $0x28] sm:$0xff] %vm48, 0.0
    %53 = vst [vmem:[#allocation2 + $0x30] sm:$0xf] 0.0
    %54 = vst [vmem:[#allocation2 + $0x38] sm:$0xf] 0.0
    %vm55 = vcmask 257024
    %56 = vst.msk [vmem:[#allocation2 + $0x40] sm:$0xf] %vm55, 0.0
    %v57 = vld [vmem:[%s0] sm:$0xff]
    %v58 = vld [vmem:[%s0 + $0x8] sm:$0xf]
    %v59 = vld [vmem:[%s2] sm:$0xff]
    %v60 = vld [vmem:[%s2 + $0x8] sm:$0xff]
    %v61 = vld [vmem:[%s2 + $0x10] sm:$0xff]
    %v62 = vld [vmem:[%s2 + $0x18] sm:$0xf]
    %v63 = vld [vmem:[%s2 + $0x20] sm:$0xf]
    %v64 = vld [vmem:[%s2 + $0x28] sm:$0xf]
    %v65 = vld [vmem:[%s3] sm:$0x1]
    %vm66 = vcmask 97280
    %v68 = vsel %vm66, %v57, 0
    %v71 = vsel %vm66, %v58, 0
    %vm73 = vcmask 1043456
    %v75 = vsel %vm73, %v62, 0
    %v78 = vsel %vm73, %v63, 0
    %v81 = vsel %vm73, %v64, 0
    %83 = vmatprep.subr.mxu0 %v60
    %84 = vmatpush1.msra.mxu0 %v59
    %85 = vmatprep.subr.mxu0 %v78
    %86 = vmatpush1.msra.mxu0 %v75
    %87 = vmatprep.subr.mxu0 0.0
    %88 = vmatpush1.msra.mxu0 0.0
    %89 = vmatprep.subr.mxu0 0.0
    %90 = vmatpush1.msra.mxu0 0.0
    %91 = vmatprep.subr.mxu0 0.0
    %92 = vmatpush1.msra.mxu0 0.0
    %93 = vmatprep.subr.mxu0 0.0
    %94 = vmatpush1.msra.mxu0 0.0
    %95 = vmatprep.subr.mxu0 0.0
    %96 = vmatpush1.msra.mxu0 0.0
    %97 = vmatprep.subr.mxu0 0.0
    %98 = vmatpush1.msra.mxu0 0.0
    %99 = vmatprep.subr.mxu0 0.0
    %100 = vmatpush1.msra.mxu0 0.0
    %101 = vmatprep.subr.mxu0 0.0
    %102 = vmatpush1.msra.mxu0 0.0
    %103 = vmatprep.subr.mxu0 0.0
    %104 = vmatpush1.msra.mxu0 0.0
    %105 = vmatprep.subr.mxu0 0.0
    %106 = vmatpush1.msra.mxu0 0.0
    %107 = vmatprep.subr.mxu0 0.0
    %108 = vmatpush1.msra.mxu0 0.0
    %109 = vmatprep.subr.mxu0 0.0
    %110 = vmatpush1.msra.mxu0 0.0
    %111 = vmatprep.subr.mxu0 0.0
    %112 = vmatpush1.msra.mxu0 0.0
    %113 = vmatprep.subr.mxu0 0.0
    %114 = vmatpush1.msra.mxu0 0.0
    %115 = vmatprep.subr.mxu0 0.0
    %116 = vmatpush1.msra.mxu0 0.0
    %117 = vmatprep.subr.mxu0 0.0
    %118 = vmatpush1.msra.mxu0 0.0
    %119 = vmatprep.subr.mxu0 0.0
    %120 = vmatpush1.msra.mxu0 0.0
    %121 = vmatprep.subr.mxu0 0.0
    %122 = vmatpush1.msra.mxu0 0.0
    %123 = vmatprep.subr.mxu0 0.0
    %124 = vmatpush1.msra.mxu0 0.0
    %125 = vmatprep.subr.mxu0 0.0
    %126 = vmatpush1.msra.mxu0 0.0
    %127 = vmatprep.subr.mxu0 0.0
    %128 = vmatpush1.msra.mxu0 0.0
    %129 = vmatprep.subr.mxu0 0.0
    %130 = vmatpush1.msra.mxu0 0.0
    %131 = vmatprep.subr.mxu0 0.0
    %132 = vmatpush1.msra.mxu0 0.0
    %133 = vmatprep.subr.mxu0 0.0
    %134 = vmatpush1.msra.mxu0 0.0
    %135 = vmatprep.subr.mxu0 0.0
    %136 = vmatpush1.msra.mxu0 0.0
    %137 = vmatprep.subr.mxu0 0.0
    %138 = vmatpush1.msra.mxu0 0.0
    %139 = vmatprep.subr.mxu0 0.0
    %140 = vmatpush1.msra.mxu0 0.0
    %141 = vmatprep.subr.mxu0 0.0
    %142 = vmatpush1.msra.mxu0 0.0
    %143 = vmatprep.subr.mxu0 0.0
    %144 = vmatpush1.msra.mxu0 0.0
    %145 = vmatprep.subr.mxu0 0.0
    %146 = vmatpush1.msra.mxu0 0.0
    %147 = vmatprep.mubr.f32.mxu0 0.0
    %148 = vmatmul.mubr.f32.gmra.mrb[0].mxu0 %v68
    %v149 = vpop.f32.mrb[0].mxu0
    %v150 = vadd.f32 0.0, %v149
    %v151 = vpop.f32.mrb[0].mxu0
    %v152 = vadd.f32 0.0, %v151
    %153 = vmatprep.mubr.f32.mxu0 0.0
    %154 = vmatmul.mubr.f32.gmra.mrb[0].mxu0 %v71
    %v155 = vpop.f32.mrb[0].mxu0
    %v156 = vadd.f32 0.0, %v155
    %v157 = vpop.f32.mrb[0].mxu0
    %v158 = vadd.f32 0.0, %v157
    %159 = vdwg.mxu0
    %160 = vmatprep.subr.mxu0 0.0
    %161 = vmatpush1.msra.mxu0 %v61
    %162 = vmatprep.subr.mxu0 0.0
    %163 = vmatpush1.msra.mxu0 %v81
    %164 = vmatprep.subr.mxu0 0.0
    %165 = vmatpush1.msra.mxu0 0.0
    %166 = vmatprep.subr.mxu0 0.0
    %167 = vmatpush1.msra.mxu0 0.0
    %168 = vmatprep.subr.mxu0 0.0
    %169 = vmatpush1.msra.mxu0 0.0
    %170 = vmatprep.subr.mxu0 0.0
    %171 = vmatpush1.msra.mxu0 0.0
    %172 = vmatprep.subr.mxu0 0.0
    %173 = vmatpush1.msra.mxu0 0.0
    %174 = vmatprep.subr.mxu0 0.0
    %175 = vmatpush1.msra.mxu0 0.0
    %176 = vmatprep.subr.mxu0 0.0
    %177 = vmatpush1.msra.mxu0 0.0
    %178 = vmatprep.subr.mxu0 0.0
    %179 = vmatpush1.msra.mxu0 0.0
    %180 = vmatprep.subr.mxu0 0.0
    %181 = vmatpush1.msra.mxu0 0.0
    %182 = vmatprep.subr.mxu0 0.0
    %183 = vmatpush1.msra.mxu0 0.0
    %184 = vmatprep.subr.mxu0 0.0
    %185 = vmatpush1.msra.mxu0 0.0
    %186 = vmatprep.subr.mxu0 0.0
    %187 = vmatpush1.msra.mxu0 0.0
    %188 = vmatprep.subr.mxu0 0.0
    %189 = vmatpush1.msra.mxu0 0.0
    %190 = vmatprep.subr.mxu0 0.0
    %191 = vmatpush1.msra.mxu0 0.0
    %192 = vmatprep.subr.mxu0 0.0
    %193 = vmatpush1.msra.mxu0 0.0
    %194 = vmatprep.subr.mxu0 0.0
    %195 = vmatpush1.msra.mxu0 0.0
    %196 = vmatprep.subr.mxu0 0.0
    %197 = vmatpush1.msra.mxu0 0.0
    %198 = vmatprep.subr.mxu0 0.0
    %199 = vmatpush1.msra.mxu0 0.0
    %200 = vmatprep.subr.mxu0 0.0
    %201 = vmatpush1.msra.mxu0 0.0
    %202 = vmatprep.subr.mxu0 0.0
    %203 = vmatpush1.msra.mxu0 0.0
    %204 = vmatprep.subr.mxu0 0.0
    %205 = vmatpush1.msra.mxu0 0.0
    %206 = vmatprep.subr.mxu0 0.0
    %207 = vmatpush1.msra.mxu0 0.0
    %208 = vmatprep.subr.mxu0 0.0
    %209 = vmatpush1.msra.mxu0 0.0
    %210 = vmatprep.subr.mxu0 0.0
    %211 = vmatpush1.msra.mxu0 0.0
    %212 = vmatprep.subr.mxu0 0.0
    %213 = vmatpush1.msra.mxu0 0.0
    %214 = vmatprep.subr.mxu0 0.0
    %215 = vmatpush1.msra.mxu0 0.0
    %216 = vmatprep.subr.mxu0 0.0
    %217 = vmatpush1.msra.mxu0 0.0
    %218 = vmatprep.subr.mxu0 0.0
    %219 = vmatpush1.msra.mxu0 0.0
    %220 = vmatprep.subr.mxu0 0.0
    %221 = vmatpush1.msra.mxu0 0.0
    %222 = vmatprep.subr.mxu0 0.0
    %223 = vmatpush1.msra.mxu0 0.0
    %224 = vmatprep.mubr.f32.mxu0 0.0
    %225 = vmatmul.mubr.f32.gmra.mrb[0].mxu0 %v68
    %v226 = vpop.f32.mrb[0].mxu0
    %v227 = vadd.f32 0.0, %v226
    %v228 = vpop.f32.mrb[0].mxu0
    %229 = vmatprep.mubr.f32.mxu0 0.0
    %230 = vmatmul.mubr.f32.gmra.mrb[0].mxu0 %v71
    %v231 = vpop.f32.mrb[0].mxu0
    %v232 = vadd.f32 0.0, %v231
    %v233 = vpop.f32.mrb[0].mxu0
    %234 = vdwg.mxu0
    %v235 = vld [vmem:[%s1] sm:$0xff]
    %v236 = vld [vmem:[%s1 + $0x8] sm:$0xff]
    %v237 = vld [vmem:[%s1 + $0x10] sm:$0xff]
    %v238 = vld [vmem:[%s1 + $0x18] sm:$0xf]
    %v239 = vld [vmem:[%s1 + $0x20] sm:$0xf]
    %v240 = vld [vmem:[%s1 + $0x28] sm:$0xf]
    %v241 = vmul.f32 %v150, %v235
    %v242 = vmul.f32 %v152, %v236
    %v243 = vmul.f32 %v227, %v237
    %v244 = vmul.f32 %v156, %v238
    %v245 = vmul.f32 %v158, %v239
    %v246 = vmul.f32 %v232, %v240
    %v253 = vrot.slane %v241, 4
    %v254 = vrot.slane %v242, 4
    %v255 = vrot.slane %v243, 4
    %v256 = vrot.slane %v244, 4
    %v257 = vsel %vm73, %v253, %v256
    %v258 = vrot.slane %v245, 4
    %v259 = vsel %vm73, %v254, %v258
    %v260 = vrot.slane %v246, 4
    %v261 = vsel %vm73, %v255, %v260
    %268 = vst [vmem:[#allocation2] sm:$0xf0] %v253
    %269 = vst [vmem:[#allocation2 + $0x8] sm:$0xf0] %v254
    %vm270 = vcmask 261124
    %271 = vst.msk [vmem:[#allocation2 + $0x10] sm:$0xf0] %vm270, %v255
    %272 = vst [vmem:[#allocation2 + $0x18] sm:$0xff] %v257
    %273 = vst [vmem:[#allocation2 + $0x20] sm:$0xff] %v259
    %274 = vst.msk [vmem:[#allocation2 + $0x28] sm:$0xff] %vm48, %v261
    %v275 = vld [vmem:[#allocation2] sm:$0xff]
    %v276 = vld [vmem:[#allocation2 + $0x18] sm:$0xf]
    %v277 = vld [vmem:[#allocation2] sm:$0xfe]
    %v278 = vld [vmem:[#allocation2 + $0x18] sm:$0x1f]
    %v279 = vld [vmem:[#allocation2] sm:$0xfc]
    %v280 = vld [vmem:[#allocation2 + $0x18] sm:$0x3f]
    %v281 = vld [vmem:[#allocation2] sm:$0xf8]
    %v282 = vld [vmem:[#allocation2 + $0x18] sm:$0x7f]
    %v283 = vld [vmem:[#allocation2 + $0x8] sm:$0xf0]
    %v284 = vld [vmem:[#allocation2 + $0x20] sm:$0xff]
    %v285 = vld [vmem:[#allocation2 + $0x8] sm:$0xe0]
    %v286 = vld [vmem:[#allocation2 + $0x38] sm:$0x1]
    %v287 = vld [vmem:[#allocation2 + $0x8] sm:$0xc0]
    %v288 = vld [vmem:[#allocation2 + $0x38] sm:$0x3]
    %v289 = vld [vmem:[#allocation2 + $0x8] sm:$0x80]
    %v290 = vld [vmem:[#allocation2 + $0x38] sm:$0x7]
    %v291 = vld [vmem:[#allocation2 + $0x28] sm:$0xff]
    %v292 = vld [vmem:[#allocation2 + $0x40] sm:$0xf]
    %vm295 = vcmask 1046528
    %v296 = vrot.slane %v277, 1
    %v297 = vrot.slane %v278, 1
    %v298 = vsel %vm295, %v296, %v297
    %299 = vrot.lane.b32.xlu0 %v298, 96
    %v300 = vpop.permute.xlu0 %299
    %301 = vrot.lane.b32.xlu0 %v297, 96
    %v302 = vpop.permute.xlu0 %301
    %v305 = vadd.f32 %v275, %v300
    %v306 = vadd.f32 %v276, %v302
    %vm309 = vcmask 1045504
    %v310 = vrot.slane %v279, 2
    %v311 = vrot.slane %v280, 2
    %v312 = vsel %vm309, %v310, %v311
    %313 = vrot.lane.b32.xlu0 %v312, 64
    %v314 = vpop.permute.xlu0 %313
    %315 = vrot.lane.b32.xlu0 %v311, 64
    %v316 = vpop.permute.xlu0 %315
    %v319 = vadd.f32 %v305, %v314
    %v320 = vadd.f32 %v306, %v316
    %v323 = vrot.slane %v283, 1
    %v324 = vrot.slane %v284, 1
    %v325 = vsel %vm295, %v323, %v324
    %326 = vrot.lane.b32.xlu0 %v325, 96
    %v327 = vpop.permute.xlu0 %326
    %328 = vrot.lane.b32.xlu0 %v324, 96
    %v329 = vpop.permute.xlu0 %328
    %v332 = vadd.f32 %v281, %v327
    %v333 = vadd.f32 %v282, %v329
    %v336 = vrot.slane %v285, 2
    %v337 = vrot.slane %v284, 2
    %v338 = vsel %vm309, %v336, %v337
    %v339 = vrot.slane %v286, 2
    %v340 = vsel %vm309, %v337, %v339
    %341 = vrot.lane.b32.xlu0 %v338, 64
    %v342 = vpop.permute.xlu0 %341
    %343 = vrot.lane.b32.xlu0 %v340, 64
    %v344 = vpop.permute.xlu0 %343
    %v347 = vadd.f32 %v332, %v342
    %v348 = vadd.f32 %v333, %v344
    %vm351 = vcmask 1044480
    %v352 = vrot.slane %v347, 3
    %v353 = vrot.slane %v348, 3
    %v354 = vsel %vm351, %v352, %v353
    %355 = vrot.lane.b32.xlu0 %v354, 32
    %v356 = vpop.permute.xlu0 %355
    %357 = vrot.lane.b32.xlu0 %v353, 32
    %v358 = vpop.permute.xlu0 %357
    %v361 = vadd.f32 %v319, %v356
    %v362 = vadd.f32 %v320, %v358
    %v365 = vrot.slane %v289, 1
    %v366 = vsel %vm295, %v365, %v324
    %v367 = vrot.slane %v290, 1
    %v368 = vsel %vm295, %v324, %v367
    %369 = vrot.lane.b32.xlu0 %v366, 96
    %v370 = vpop.permute.xlu0 %369
    %371 = vrot.lane.b32.xlu0 %v368, 96
    %v372 = vpop.permute.xlu0 %371
    %373 = vrot.lane.b32.xlu0 %v367, 96
    %v374 = vpop.permute.xlu0 %373
    %v378 = vadd.f32 %v287, %v370
    %v379 = vadd.f32 %v284, %v372
    %v380 = vadd.f32 %v288, %v374
    %v383 = vrot.slane %v291, 2
    %v384 = vrot.slane %v292, 2
    %v385 = vsel %vm309, %v383, %v384
    %386 = vrot.lane.b32.xlu0 %v383, 64
    %v387 = vpop.permute.xlu0 %386
    %388 = vrot.lane.b32.xlu0 %v385, 64
    %v389 = vpop.permute.xlu0 %388
    %390 = vrot.lane.b32.xlu0 %v384, 64
    %v391 = vpop.permute.xlu0 %390
    %v395 = vadd.f32 %v378, %v387
    %v396 = vadd.f32 %v379, %v389
    %v397 = vadd.f32 %v380, %v391
    %vm401 = vcmask 1041408
    %v402 = vrot.slane %v395, 6
    %v403 = vrot.slane %v396, 6
    %v404 = vsel %vm401, %v402, %v403
    %v405 = vrot.slane %v397, 6
    %v406 = vsel %vm401, %v403, %v405
    %407 = vrot.lane.b32.xlu0 %v404, 64
    %v408 = vpop.permute.xlu0 %407
    %409 = vrot.lane.b32.xlu0 %v406, 64
    %v410 = vpop.permute.xlu0 %409
    %v413 = vadd.f32 %v361, %v408
    %v414 = vadd.f32 %v362, %v410
    %v416 = vlaneseq
    %v417 = vshrl.u32 %v416, 7
    %v418 = vsub.s32 0, %v417
    %v419 = vrot.slane %v65, %v418
    %v421 = vadd.f32 %v413, %v419
    %v422 = vadd.f32 %v414, %v419
    %v423 = vmax.f32 %v421, 0.0
    %v424 = vmax.f32 %v422, 0.0
    %v425 = vld [vmem:[%s4] sm:$0xff]
    %v426 = vld [vmem:[%s4 + $0x8] sm:$0xff]
    %v427 = vld [vmem:[%s4 + $0x10] sm:$0xff]
    %v428 = vld [vmem:[%s4 + $0x18] sm:$0xff]
    %v429 = vld [vmem:[%s4 + $0x20] sm:$0xff]
    %v430 = vld [vmem:[%s4 + $0x28] sm:$0xff]
    %v431 = vld [vmem:[%s4 + $0x30] sm:$0xff]
    %v432 = vld [vmem:[%s4 + $0x38] sm:$0xff]
    %v433 = vld [vmem:[%s4 + $0x40] sm:$0xff]
    %v434 = vld [vmem:[%s4 + $0x48] sm:$0xff]
    %v435 = vld [vmem:[%s4 + $0x50] sm:$0xff]
    %v436 = vld [vmem:[%s4 + $0x58] sm:$0xff]
    %v437 = vld [vmem:[%s5] sm:$0x1]
    %v439 = vsel %vm48, %v423, 0
    %v442 = vsel %vm48, %v424, 0
    %444 = vmatprep.subr.mxu0 %v426
    %445 = vmatpush1.msra.mxu0 %v425
    %446 = vmatprep.subr.mxu0 %v429
    %447 = vmatpush1.msra.mxu0 %v428
    %448 = vmatprep.subr.mxu0 %v432
    %449 = vmatpush1.msra.mxu0 %v431
    %450 = vmatprep.subr.mxu0 %v435
    %451 = vmatpush1.msra.mxu0 %v434
    %452 = vmatprep.subr.mxu0 0.0
    %453 = vmatpush1.msra.mxu0 0.0
    %454 = vmatprep.subr.mxu0 0.0
    %455 = vmatpush1.msra.mxu0 0.0
    %456 = vmatprep.subr.mxu0 0.0
    %457 = vmatpush1.msra.mxu0 0.0
    %458 = vmatprep.subr.mxu0 0.0
    %459 = vmatpush1.msra.mxu0 0.0
    %460 = vmatprep.subr.mxu0 0.0
    %461 = vmatpush1.msra.mxu0 0.0
    %462 = vmatprep.subr.mxu0 0.0
    %463 = vmatpush1.msra.mxu0 0.0
    %464 = vmatprep.subr.mxu0 0.0
    %465 = vmatpush1.msra.mxu0 0.0
    %466 = vmatprep.subr.mxu0 0.0
    %467 = vmatpush1.msra.mxu0 0.0
    %468 = vmatprep.subr.mxu0 0.0
    %469 = vmatpush1.msra.mxu0 0.0
    %470 = vmatprep.subr.mxu0 0.0
    %471 = vmatpush1.msra.mxu0 0.0
    %472 = vmatprep.subr.mxu0 0.0
    %473 = vmatpush1.msra.mxu0 0.0
    %474 = vmatprep.subr.mxu0 0.0
    %475 = vmatpush1.msra.mxu0 0.0
    %476 = vmatprep.subr.mxu0 0.0
    %477 = vmatpush1.msra.mxu0 0.0
    %478 = vmatprep.subr.mxu0 0.0
    %479 = vmatpush1.msra.mxu0 0.0
    %480 = vmatprep.subr.mxu0 0.0
    %481 = vmatpush1.msra.mxu0 0.0
    %482 = vmatprep.subr.mxu0 0.0
    %483 = vmatpush1.msra.mxu0 0.0
    %484 = vmatprep.subr.mxu0 0.0
    %485 = vmatpush1.msra.mxu0 0.0
    %486 = vmatprep.subr.mxu0 0.0
    %487 = vmatpush1.msra.mxu0 0.0
    %488 = vmatprep.subr.mxu0 0.0
    %489 = vmatpush1.msra.mxu0 0.0
    %490 = vmatprep.subr.mxu0 0.0
    %491 = vmatpush1.msra.mxu0 0.0
    %492 = vmatprep.subr.mxu0 0.0
    %493 = vmatpush1.msra.mxu0 0.0
    %494 = vmatprep.subr.mxu0 0.0
    %495 = vmatpush1.msra.mxu0 0.0
    %496 = vmatprep.subr.mxu0 0.0
    %497 = vmatpush1.msra.mxu0 0.0
    %498 = vmatprep.subr.mxu0 0.0
    %499 = vmatpush1.msra.mxu0 0.0
    %500 = vmatprep.subr.mxu0 0.0
    %501 = vmatpush1.msra.mxu0 0.0
    %502 = vmatprep.subr.mxu0 0.0
    %503 = vmatpush1.msra.mxu0 0.0
    %504 = vmatprep.subr.mxu0 0.0
    %505 = vmatpush1.msra.mxu0 0.0
    %506 = vmatprep.subr.mxu0 0.0
    %507 = vmatpush1.msra.mxu0 0.0
    %508 = vmatprep.mubr.f32.mxu0 0.0
    %509 = vmatmul.mubr.f32.gmra.mrb[0].mxu0 %v439
    %v510 = vpop.f32.mrb[0].mxu0
    %v511 = vadd.f32 0.0, %v510
    %v512 = vpop.f32.mrb[0].mxu0
    %v513 = vadd.f32 0.0, %v512
    %514 = vmatprep.mubr.f32.mxu0 0.0
    %515 = vmatmul.mubr.f32.gmra.mrb[0].mxu0 %v442
    %v516 = vpop.f32.mrb[0].mxu0
    %v517 = vadd.f32 0.0, %v516
    %v518 = vpop.f32.mrb[0].mxu0
    %v519 = vadd.f32 0.0, %v518
    %520 = vdwg.mxu0
    %521 = vmatprep.subr.mxu0 0.0
    %522 = vmatpush1.msra.mxu0 %v427
    %523 = vmatprep.subr.mxu0 0.0
    %524 = vmatpush1.msra.mxu0 %v430
    %525 = vmatprep.subr.mxu0 0.0
    %526 = vmatpush1.msra.mxu0 %v433
    %527 = vmatprep.subr.mxu0 0.0
    %528 = vmatpush1.msra.mxu0 %v436
    %529 = vmatprep.subr.mxu0 0.0
    %530 = vmatpush1.msra.mxu0 0.0
    %531 = vmatprep.subr.mxu0 0.0
    %532 = vmatpush1.msra.mxu0 0.0
    %533 = vmatprep.subr.mxu0 0.0
    %534 = vmatpush1.msra.mxu0 0.0
    %535 = vmatprep.subr.mxu0 0.0
    %536 = vmatpush1.msra.mxu0 0.0
    %537 = vmatprep.subr.mxu0 0.0
    %538 = vmatpush1.msra.mxu0 0.0
    %539 = vmatprep.subr.mxu0 0.0
    %540 = vmatpush1.msra.mxu0 0.0
    %541 = vmatprep.subr.mxu0 0.0
    %542 = vmatpush1.msra.mxu0 0.0
    %543 = vmatprep.subr.mxu0 0.0
    %544 = vmatpush1.msra.mxu0 0.0
    %545 = vmatprep.subr.mxu0 0.0
    %546 = vmatpush1.msra.mxu0 0.0
    %547 = vmatprep.subr.mxu0 0.0
    %548 = vmatpush1.msra.mxu0 0.0
    %549 = vmatprep.subr.mxu0 0.0
    %550 = vmatpush1.msra.mxu0 0.0
    %551 = vmatprep.subr.mxu0 0.0
    %552 = vmatpush1.msra.mxu0 0.0
    %553 = vmatprep.subr.mxu0 0.0
    %554 = vmatpush1.msra.mxu0 0.0
    %555 = vmatprep.subr.mxu0 0.0
    %556 = vmatpush1.msra.mxu0 0.0
    %557 = vmatprep.subr.mxu0 0.0
    %558 = vmatpush1.msra.mxu0 0.0
    %559 = vmatprep.subr.mxu0 0.0
    %560 = vmatpush1.msra.mxu0 0.0
    %561 = vmatprep.subr.mxu0 0.0
    %562 = vmatpush1.msra.mxu0 0.0
    %563 = vmatprep.subr.mxu0 0.0
    %564 = vmatpush1.msra.mxu0 0.0
    %565 = vmatprep.subr.mxu0 0.0
    %566 = vmatpush1.msra.mxu0 0.0
    %567 = vmatprep.subr.mxu0 0.0
    %568 = vmatpush1.msra.mxu0 0.0
    %569 = vmatprep.subr.mxu0 0.0
    %570 = vmatpush1.msra.mxu0 0.0
    %571 = vmatprep.subr.mxu0 0.0
    %572 = vmatpush1.msra.mxu0 0.0
    %573 = vmatprep.subr.mxu0 0.0
    %574 = vmatpush1.msra.mxu0 0.0
    %575 = vmatprep.subr.mxu0 0.0
    %576 = vmatpush1.msra.mxu0 0.0
    %577 = vmatprep.subr.mxu0 0.0
    %578 = vmatpush1.msra.mxu0 0.0
    %579 = vmatprep.subr.mxu0 0.0
    %580 = vmatpush1.msra.mxu0 0.0
    %581 = vmatprep.subr.mxu0 0.0
    %582 = vmatpush1.msra.mxu0 0.0
    %583 = vmatprep.subr.mxu0 0.0
    %584 = vmatpush1.msra.mxu0 0.0
    %585 = vmatprep.mubr.f32.mxu0 0.0
    %586 = vmatmul.mubr.f32.gmra.mrb[0].mxu0 %v439
    %v587 = vpop.f32.mrb[0].mxu0
    %v588 = vadd.f32 0.0, %v587
    %v589 = vpop.f32.mrb[0].mxu0
    %590 = vmatprep.mubr.f32.mxu0 0.0
    %591 = vmatmul.mubr.f32.gmra.mrb[0].mxu0 %v442
    %v592 = vpop.f32.mrb[0].mxu0
    %v593 = vadd.f32 0.0, %v592
    %v594 = vpop.f32.mrb[0].mxu0
    %595 = vdwg.mxu0
    %v596 = vld [vmem:[%s1] sm:$0xff]
    %v597 = vld [vmem:[%s1 + $0x8] sm:$0xff]
    %v598 = vld [vmem:[%s1 + $0x10] sm:$0xff]
    %v599 = vld [vmem:[%s1 + $0x18] sm:$0xf]
    %v600 = vld [vmem:[%s1 + $0x20] sm:$0xf]
    %v601 = vld [vmem:[%s1 + $0x28] sm:$0xf]
    %v602 = vmul.f32 %v511, %v596
    %v603 = vmul.f32 %v513, %v597
    %v604 = vmul.f32 %v588, %v598
    %v605 = vmul.f32 %v517, %v599
    %v606 = vmul.f32 %v519, %v600
    %v607 = vmul.f32 %v593, %v601
    %v614 = vrot.slane %v602, 4
    %v615 = vrot.slane %v603, 4
    %v616 = vrot.slane %v604, 4
    %v617 = vrot.slane %v605, 4
    %v618 = vsel %vm73, %v614, %v617
    %v619 = vrot.slane %v606, 4
    %v620 = vsel %vm73, %v615, %v619
    %v621 = vrot.slane %v607, 4
    %v622 = vsel %vm73, %v616, %v621
    %629 = vst [vmem:[#allocation2] sm:$0xf0] %v614
    %630 = vst [vmem:[#allocation2 + $0x8] sm:$0xf0] %v615
    %631 = vst.msk [vmem:[#allocation2 + $0x10] sm:$0xf0] %vm270, %v616
    %632 = vst [vmem:[#allocation2 + $0x18] sm:$0xff] %v618
    %633 = vst [vmem:[#allocation2 + $0x20] sm:$0xff] %v620
    %634 = vst.msk [vmem:[#allocation2 + $0x28] sm:$0xff] %vm48, %v622
    %v635 = vld [vmem:[#allocation2] sm:$0xff]
    %v636 = vld [vmem:[#allocation2 + $0x18] sm:$0xf]
    %v637 = vld [vmem:[#allocation2] sm:$0xfe]
    %v638 = vld [vmem:[#allocation2 + $0x18] sm:$0x1f]
    %v639 = vld [vmem:[#allocation2] sm:$0xfc]
    %v640 = vld [vmem:[#allocation2 + $0x18] sm:$0x3f]
    %v641 = vld [vmem:[#allocation2] sm:$0xf8]
    %v642 = vld [vmem:[#allocation2 + $0x18] sm:$0x7f]
    %v643 = vld [vmem:[#allocation2 + $0x8] sm:$0xf0]
    %v644 = vld [vmem:[#allocation2 + $0x20] sm:$0xff]
    %v645 = vld [vmem:[#allocation2 + $0x8] sm:$0xe0]
    %v646 = vld [vmem:[#allocation2 + $0x38] sm:$0x1]
    %v647 = vld [vmem:[#allocation2 + $0x8] sm:$0xc0]
    %v648 = vld [vmem:[#allocation2 + $0x38] sm:$0x3]
    %v649 = vld [vmem:[#allocation2 + $0x8] sm:$0x80]
    %v650 = vld [vmem:[#allocation2 + $0x38] sm:$0x7]
    %v651 = vld [vmem:[#allocation2 + $0x28] sm:$0xff]
    %v652 = vld [vmem:[#allocation2 + $0x40] sm:$0xf]
    %v655 = vrot.slane %v637, 1
    %v656 = vrot.slane %v638, 1
    %v657 = vsel %vm295, %v655, %v656
    %658 = vrot.lane.b32.xlu0 %v657, 96
    %v659 = vpop.permute.xlu0 %658
    %660 = vrot.lane.b32.xlu0 %v656, 96
    %v661 = vpop.permute.xlu0 %660
    %v664 = vadd.f32 %v635, %v659
    %v665 = vadd.f32 %v636, %v661
    %v668 = vrot.slane %v639, 2
    %v669 = vrot.slane %v640, 2
    %v670 = vsel %vm309, %v668, %v669
    %671 = vrot.lane.b32.xlu0 %v670, 64
    %v672 = vpop.permute.xlu0 %671
    %673 = vrot.lane.b32.xlu0 %v669, 64
    %v674 = vpop.permute.xlu0 %673
    %v677 = vadd.f32 %v664, %v672
    %v678 = vadd.f32 %v665, %v674
    %v681 = vrot.slane %v643, 1
    %v682 = vrot.slane %v644, 1
    %v683 = vsel %vm295, %v681, %v682
    %684 = vrot.lane.b32.xlu0 %v683, 96
    %v685 = vpop.permute.xlu0 %684
    %686 = vrot.lane.b32.xlu0 %v682, 96
    %v687 = vpop.permute.xlu0 %686
    %v690 = vadd.f32 %v641, %v685
    %v691 = vadd.f32 %v642, %v687
    %v694 = vrot.slane %v645, 2
    %v695 = vrot.slane %v644, 2
    %v696 = vsel %vm309, %v694, %v695
    %v697 = vrot.slane %v646, 2
    %v698 = vsel %vm309, %v695, %v697
    %699 = vrot.lane.b32.xlu0 %v696, 64
    %v700 = vpop.permute.xlu0 %699
    %701 = vrot.lane.b32.xlu0 %v698, 64
    %v702 = vpop.permute.xlu0 %701
    %v705 = vadd.f32 %v690, %v700
    %v706 = vadd.f32 %v691, %v702
    %v709 = vrot.slane %v705, 3
    %v710 = vrot.slane %v706, 3
    %v711 = vsel %vm351, %v709, %v710
    %712 = vrot.lane.b32.xlu0 %v711, 32
    %v713 = vpop.permute.xlu0 %712
    %714 = vrot.lane.b32.xlu0 %v710, 32
    %v715 = vpop.permute.xlu0 %714
    %v718 = vadd.f32 %v677, %v713
    %v719 = vadd.f32 %v678, %v715
    %v722 = vrot.slane %v649, 1
    %v723 = vsel %vm295, %v722, %v682
    %v724 = vrot.slane %v650, 1
    %v725 = vsel %vm295, %v682, %v724
    %726 = vrot.lane.b32.xlu0 %v723, 96
    %v727 = vpop.permute.xlu0 %726
    %728 = vrot.lane.b32.xlu0 %v725, 96
    %v729 = vpop.permute.xlu0 %728
    %730 = vrot.lane.b32.xlu0 %v724, 96
    %v731 = vpop.permute.xlu0 %730
    %v735 = vadd.f32 %v647, %v727
    %v736 = vadd.f32 %v644, %v729
    %v737 = vadd.f32 %v648, %v731
    %v740 = vrot.slane %v651, 2
    %v741 = vrot.slane %v652, 2
    %v742 = vsel %vm309, %v740, %v741
    %743 = vrot.lane.b32.xlu0 %v740, 64
    %v744 = vpop.permute.xlu0 %743
    %745 = vrot.lane.b32.xlu0 %v742, 64
    %v746 = vpop.permute.xlu0 %745
    %747 = vrot.lane.b32.xlu0 %v741, 64
    %v748 = vpop.permute.xlu0 %747
    %v752 = vadd.f32 %v735, %v744
    %v753 = vadd.f32 %v736, %v746
    %v754 = vadd.f32 %v737, %v748
    %v758 = vrot.slane %v752, 6
    %v759 = vrot.slane %v753, 6
    %v760 = vsel %vm401, %v758, %v759
    %v761 = vrot.slane %v754, 6
    %v762 = vsel %vm401, %v759, %v761
    %763 = vrot.lane.b32.xlu0 %v760, 64
    %v764 = vpop.permute.xlu0 %763
    %765 = vrot.lane.b32.xlu0 %v762, 64
    %v766 = vpop.permute.xlu0 %765
    %v769 = vadd.f32 %v718, %v764
    %v770 = vadd.f32 %v719, %v766
    %v772 = vlaneseq
    %v773 = vshrl.u32 %v772, 7
    %v774 = vsub.s32 0, %v773
    %v775 = vrot.slane %v437, %v774
    %v777 = vadd.f32 %v769, %v775
    %v778 = vadd.f32 %v770, %v775
    %v779 = vmax.f32 %v777, 0.0
    %v780 = vmax.f32 %v778, 0.0
    %s781 = scalar_lea.vmem %s4, 96
    %v782 = vld [vmem:[%s781] sm:$0xff]
    %v783 = vld [vmem:[%s781 + $0x8] sm:$0xff]
    %v784 = vld [vmem:[%s781 + $0x10] sm:$0xff]
    %v785 = vld [vmem:[%s781 + $0x18] sm:$0xff]
    %v786 = vld [vmem:[%s781 + $0x20] sm:$0xff]
    %v787 = vld [vmem:[%s781 + $0x28] sm:$0xff]
    %v788 = vld [vmem:[%s781 + $0x30] sm:$0xff]
    %v789 = vld [vmem:[%s781 + $0x38] sm:$0xff]
    %v790 = vld [vmem:[%s781 + $0x40] sm:$0xff]
    %v791 = vld [vmem:[%s781 + $0x48] sm:$0xff]
    %v792 = vld [vmem:[%s781 + $0x50] sm:$0xff]
    %v793 = vld [vmem:[%s781 + $0x58] sm:$0xff]
    %s794 = scalar_lea.vmem %s5, 1
    %v795 = vld [vmem:[%s794] sm:$0x1]
    %v797 = vsel %vm48, %v779, 0
    %v800 = vsel %vm48, %v780, 0
    %802 = vmatprep.subr.mxu0 %v783
    %803 = vmatpush1.msra.mxu0 %v782
    %804 = vmatprep.subr.mxu0 %v786
    %805 = vmatpush1.msra.mxu0 %v785
    %806 = vmatprep.subr.mxu0 %v789
    %807 = vmatpush1.msra.mxu0 %v788
    %808 = vmatprep.subr.mxu0 %v792
    %809 = vmatpush1.msra.mxu0 %v791
    %810 = vmatprep.subr.mxu0 0.0
    %811 = vmatpush1.msra.mxu0 0.0
    %812 = vmatprep.subr.mxu0 0.0
    %813 = vmatpush1.msra.mxu0 0.0
    %814 = vmatprep.subr.mxu0 0.0
    %815 = vmatpush1.msra.mxu0 0.0
    %816 = vmatprep.subr.mxu0 0.0
    %817 = vmatpush1.msra.mxu0 0.0
    %818 = vmatprep.subr.mxu0 0.0
    %819 = vmatpush1.msra.mxu0 0.0
    %820 = vmatprep.subr.mxu0 0.0
    %821 = vmatpush1.msra.mxu0 0.0
    %822 = vmatprep.subr.mxu0 0.0
    %823 = vmatpush1.msra.mxu0 0.0
    %824 = vmatprep.subr.mxu0 0.0
    %825 = vmatpush1.msra.mxu0 0.0
    %826 = vmatprep.subr.mxu0 0.0
    %827 = vmatpush1.msra.mxu0 0.0
    %828 = vmatprep.subr.mxu0 0.0
    %829 = vmatpush1.msra.mxu0 0.0
    %830 = vmatprep.subr.mxu0 0.0
    %831 = vmatpush1.msra.mxu0 0.0
    %832 = vmatprep.subr.mxu0 0.0
    %833 = vmatpush1.msra.mxu0 0.0
    %834 = vmatprep.subr.mxu0 0.0
    %835 = vmatpush1.msra.mxu0 0.0
    %836 = vmatprep.subr.mxu0 0.0
    %837 = vmatpush1.msra.mxu0 0.0
    %838 = vmatprep.subr.mxu0 0.0
    %839 = vmatpush1.msra.mxu0 0.0
    %840 = vmatprep.subr.mxu0 0.0
    %841 = vmatpush1.msra.mxu0 0.0
    %842 = vmatprep.subr.mxu0 0.0
    %843 = vmatpush1.msra.mxu0 0.0
    %844 = vmatprep.subr.mxu0 0.0
    %845 = vmatpush1.msra.mxu0 0.0
    %846 = vmatprep.subr.mxu0 0.0
    %847 = vmatpush1.msra.mxu0 0.0
    %848 = vmatprep.subr.mxu0 0.0
    %849 = vmatpush1.msra.mxu0 0.0
    %850 = vmatprep.subr.mxu0 0.0
    %851 = vmatpush1.msra.mxu0 0.0
    %852 = vmatprep.subr.mxu0 0.0
    %853 = vmatpush1.msra.mxu0 0.0
    %854 = vmatprep.subr.mxu0 0.0
    %855 = vmatpush1.msra.mxu0 0.0
    %856 = vmatprep.subr.mxu0 0.0
    %857 = vmatpush1.msra.mxu0 0.0
    %858 = vmatprep.subr.mxu0 0.0
    %859 = vmatpush1.msra.mxu0 0.0
    %860 = vmatprep.subr.mxu0 0.0
    %861 = vmatpush1.msra.mxu0 0.0
    %862 = vmatprep.subr.mxu0 0.0
    %863 = vmatpush1.msra.mxu0 0.0
    %864 = vmatprep.subr.mxu0 0.0
    %865 = vmatpush1.msra.mxu0 0.0
    %866 = vmatprep.mubr.f32.mxu0 0.0
    %867 = vmatmul.mubr.f32.gmra.mrb[0].mxu0 %v797
    %v868 = vpop.f32.mrb[0].mxu0
    %v869 = vadd.f32 0.0, %v868
    %v870 = vpop.f32.mrb[0].mxu0
    %v871 = vadd.f32 0.0, %v870
    %872 = vmatprep.mubr.f32.mxu0 0.0
    %873 = vmatmul.mubr.f32.gmra.mrb[0].mxu0 %v800
    %v874 = vpop.f32.mrb[0].mxu0
    %v875 = vadd.f32 0.0, %v874
    %v876 = vpop.f32.mrb[0].mxu0
    %v877 = vadd.f32 0.0, %v876
    %878 = vdwg.mxu0
    %879 = vmatprep.subr.mxu0 0.0
    %880 = vmatpush1.msra.mxu0 %v784
    %881 = vmatprep.subr.mxu0 0.0
    %882 = vmatpush1.msra.mxu0 %v787
    %883 = vmatprep.subr.mxu0 0.0
    %884 = vmatpush1.msra.mxu0 %v790
    %885 = vmatprep.subr.mxu0 0.0
    %886 = vmatpush1.msra.mxu0 %v793
    %887 = vmatprep.subr.mxu0 0.0
    %888 = vmatpush1.msra.mxu0 0.0
    %889 = vmatprep.subr.mxu0 0.0
    %890 = vmatpush1.msra.mxu0 0.0
    %891 = vmatprep.subr.mxu0 0.0
    %892 = vmatpush1.msra.mxu0 0.0
    %893 = vmatprep.subr.mxu0 0.0
    %894 = vmatpush1.msra.mxu0 0.0
    %895 = vmatprep.subr.mxu0 0.0
    %896 = vmatpush1.msra.mxu0 0.0
    %897 = vmatprep.subr.mxu0 0.0
    %898 = vmatpush1.msra.mxu0 0.0
    %899 = vmatprep.subr.mxu0 0.0
    %900 = vmatpush1.msra.mxu0 0.0
    %901 = vmatprep.subr.mxu0 0.0
    %902 = vmatpush1.msra.mxu0 0.0
    %903 = vmatprep.subr.mxu0 0.0
    %904 = vmatpush1.msra.mxu0 0.0
    %905 = vmatprep.subr.mxu0 0.0
    %906 = vmatpush1.msra.mxu0 0.0
    %907 = vmatprep.subr.mxu0 0.0
    %908 = vmatpush1.msra.mxu0 0.0
    %909 = vmatprep.subr.mxu0 0.0
    %910 = vmatpush1.msra.mxu0 0.0
    %911 = vmatprep.subr.mxu0 0.0
    %912 = vmatpush1.msra.mxu0 0.0
    %913 = vmatprep.subr.mxu0 0.0
    %914 = vmatpush1.msra.mxu0 0.0
    %915 = vmatprep.subr.mxu0 0.0
    %916 = vmatpush1.msra.mxu0 0.0
    %917 = vmatprep.subr.mxu0 0.0
    %918 = vmatpush1.msra.mxu0 0.0
    %919 = vmatprep.subr.mxu0 0.0
    %920 = vmatpush1.msra.mxu0 0.0
    %921 = vmatprep.subr.mxu0 0.0
    %922 = vmatpush1.msra.mxu0 0.0
    %923 = vmatprep.subr.mxu0 0.0
    %924 = vmatpush1.msra.mxu0 0.0
    %925 = vmatprep.subr.mxu0 0.0
    %926 = vmatpush1.msra.mxu0 0.0
    %927 = vmatprep.subr.mxu0 0.0
    %928 = vmatpush1.msra.mxu0 0.0
    %929 = vmatprep.subr.mxu0 0.0
    %930 = vmatpush1.msra.mxu0 0.0
    %931 = vmatprep.subr.mxu0 0.0
    %932 = vmatpush1.msra.mxu0 0.0
    %933 = vmatprep.subr.mxu0 0.0
    %934 = vmatpush1.msra.mxu0 0.0
    %935 = vmatprep.subr.mxu0 0.0
    %936 = vmatpush1.msra.mxu0 0.0
    %937 = vmatprep.subr.mxu0 0.0
    %938 = vmatpush1.msra.mxu0 0.0
    %939 = vmatprep.subr.mxu0 0.0
    %940 = vmatpush1.msra.mxu0 0.0
    %941 = vmatprep.subr.mxu0 0.0
    %942 = vmatpush1.msra.mxu0 0.0
    %943 = vmatprep.mubr.f32.mxu0 0.0
    %944 = vmatmul.mubr.f32.gmra.mrb[0].mxu0 %v797
    %v945 = vpop.f32.mrb[0].mxu0
    %v946 = vadd.f32 0.0, %v945
    %v947 = vpop.f32.mrb[0].mxu0
    %948 = vmatprep.mubr.f32.mxu0 0.0
    %949 = vmatmul.mubr.f32.gmra.mrb[0].mxu0 %v800
    %v950 = vpop.f32.mrb[0].mxu0
    %v951 = vadd.f32 0.0, %v950
    %v952 = vpop.f32.mrb[0].mxu0
    %953 = vdwg.mxu0
    %v954 = vld [vmem:[%s1] sm:$0xff]
    %v955 = vld [vmem:[%s1 + $0x8] sm:$0xff]
    %v956 = vld [vmem:[%s1 + $0x10] sm:$0xff]
    %v957 = vld [vmem:[%s1 + $0x18] sm:$0xf]
    %v958 = vld [vmem:[%s1 + $0x20] sm:$0xf]
    %v959 = vld [vmem:[%s1 + $0x28] sm:$0xf]
    %v960 = vmul.f32 %v869, %v954
    %v961 = vmul.f32 %v871, %v955
    %v962 = vmul.f32 %v946, %v956
    %v963 = vmul.f32 %v875, %v957
    %v964 = vmul.f32 %v877, %v958
    %v965 = vmul.f32 %v951, %v959
    %v972 = vrot.slane %v960, 4
    %v973 = vrot.slane %v961, 4
    %v974 = vrot.slane %v962, 4
    %v975 = vrot.slane %v963, 4
    %v976 = vsel %vm73, %v972, %v975
    %v977 = vrot.slane %v964, 4
    %v978 = vsel %vm73, %v973, %v977
    %v979 = vrot.slane %v965, 4
    %v980 = vsel %vm73, %v974, %v979
    %987 = vst [vmem:[#allocation2] sm:$0xf0] %v972
    %988 = vst [vmem:[#allocation2 + $0x8] sm:$0xf0] %v973
    %989 = vst.msk [vmem:[#allocation2 + $0x10] sm:$0xf0] %vm270, %v974
    %990 = vst [vmem:[#allocation2 + $0x18] sm:$0xff] %v976
    %991 = vst [vmem:[#allocation2 + $0x20] sm:$0xff] %v978
    %992 = vst.msk [vmem:[#allocation2 + $0x28] sm:$0xff] %vm48, %v980
    %v993 = vld [vmem:[#allocation2] sm:$0xff]
    %v994 = vld [vmem:[#allocation2 + $0x18] sm:$0xf]
    %v995 = vld [vmem:[#allocation2] sm:$0xfe]
    %v996 = vld [vmem:[#allocation2 + $0x18] sm:$0x1f]
    %v997 = vld [vmem:[#allocation2] sm:$0xfc]
    %v998 = vld [vmem:[#allocation2 + $0x18] sm:$0x3f]
    %v999 = vld [vmem:[#allocation2] sm:$0xf8]
    %v1000 = vld [vmem:[#allocation2 + $0x18] sm:$0x7f]
    %v1001 = vld [vmem:[#allocation2 + $0x8] sm:$0xf0]
    %v1002 = vld [vmem:[#allocation2 + $0x20] sm:$0xff]
    %v1003 = vld [vmem:[#allocation2 + $0x8] sm:$0xe0]
    %v1004 = vld [vmem:[#allocation2 + $0x38] sm:$0x1]
    %v1005 = vld [vmem:[#allocation2 + $0x8] sm:$0xc0]
    %v1006 = vld [vmem:[#allocation2 + $0x38] sm:$0x3]
    %v1007 = vld [vmem:[#allocation2 + $0x8] sm:$0x80]
    %v1008 = vld [vmem:[#allocation2 + $0x38] sm:$0x7]
    %v1009 = vld [vmem:[#allocation2 + $0x28] sm:$0xff]
    %v1010 = vld [vmem:[#allocation2 + $0x40] sm:$0xf]
    %v1013 = vrot.slane %v995, 1
    %v1014 = vrot.slane %v996, 1
    %v1015 = vsel %vm295, %v1013, %v1014
    %1016 = vrot.lane.b32.xlu0 %v1015, 96
    %v1017 = vpop.permute.xlu0 %1016
    %1018 = vrot.lane.b32.xlu0 %v1014, 96
    %v1019 = vpop.permute.xlu0 %1018
    %v1022 = vadd.f32 %v993, %v1017
    %v1023 = vadd.f32 %v994, %v1019
    %v1026 = vrot.slane %v997, 2
    %v1027 = vrot.slane %v998, 2
    %v1028 = vsel %vm309, %v1026, %v1027
    %1029 = vrot.lane.b32.xlu0 %v1028, 64
    %v1030 = vpop.permute.xlu0 %1029
    %1031 = vrot.lane.b32.xlu0 %v1027, 64
    %v1032 = vpop.permute.xlu0 %1031
    %v1035 = vadd.f32 %v1022, %v1030
    %v1036 = vadd.f32 %v1023, %v1032
    %v1039 = vrot.slane %v1001, 1
    %v1040 = vrot.slane %v1002, 1
    %v1041 = vsel %vm295, %v1039, %v1040
    %1042 = vrot.lane.b32.xlu0 %v1041, 96
    %v1043 = vpop.permute.xlu0 %1042
    %1044 = vrot.lane.b32.xlu0 %v1040, 96
    %v1045 = vpop.permute.xlu0 %1044
    %v1048 = vadd.f32 %v999, %v1043
    %v1049 = vadd.f32 %v1000, %v1045
    %v1052 = vrot.slane %v1003, 2
    %v1053 = vrot.slane %v1002, 2
    %v1054 = vsel %vm309, %v1052, %v1053
    %v1055 = vrot.slane %v1004, 2
    %v1056 = vsel %vm309, %v1053, %v1055
    %1057 = vrot.lane.b32.xlu0 %v1054, 64
    %v1058 = vpop.permute.xlu0 %1057
    %1059 = vrot.lane.b32.xlu0 %v1056, 64
    %v1060 = vpop.permute.xlu0 %1059
    %v1063 = vadd.f32 %v1048, %v1058
    %v1064 = vadd.f32 %v1049, %v1060
    %v1067 = vrot.slane %v1063, 3
    %v1068 = vrot.slane %v1064, 3
    %v1069 = vsel %vm351, %v1067, %v1068
    %1070 = vrot.lane.b32.xlu0 %v1069, 32
    %v1071 = vpop.permute.xlu0 %1070
    %1072 = vrot.lane.b32.xlu0 %v1068, 32
    %v1073 = vpop.permute.xlu0 %1072
    %v1076 = vadd.f32 %v1035, %v1071
    %v1077 = vadd.f32 %v1036, %v1073
    %v1080 = vrot.slane %v1007, 1
    %v1081 = vsel %vm295, %v1080, %v1040
    %v1082 = vrot.slane %v1008, 1
    %v1083 = vsel %vm295, %v1040, %v1082
    %1084 = vrot.lane.b32.xlu0 %v1081, 96
    %v1085 = vpop.permute.xlu0 %1084
    %1086 = vrot.lane.b32.xlu0 %v1083, 96
    %v1087 = vpop.permute.xlu0 %1086
    %1088 = vrot.lane.b32.xlu0 %v1082, 96
    %v1089 = vpop.permute.xlu0 %1088
    %v1093 = vadd.f32 %v1005, %v1085
    %v1094 = vadd.f32 %v1002, %v1087
    %v1095 = vadd.f32 %v1006, %v1089
    %v1098 = vrot.slane %v1009, 2
    %v1099 = vrot.slane %v1010, 2
    %v1100 = vsel %vm309, %v1098, %v1099
    %1101 = vrot.lane.b32.xlu0 %v1098, 64
    %v1102 = vpop.permute.xlu0 %1101
    %1103 = vrot.lane.b32.xlu0 %v1100, 64
    %v1104 = vpop.permute.xlu0 %1103
    %1105 = vrot.lane.b32.xlu0 %v1099, 64
    %v1106 = vpop.permute.xlu0 %1105
    %v1110 = vadd.f32 %v1093, %v1102
    %v1111 = vadd.f32 %v1094, %v1104
    %v1112 = vadd.f32 %v1095, %v1106
    %v1116 = vrot.slane %v1110, 6
    %v1117 = vrot.slane %v1111, 6
    %v1118 = vsel %vm401, %v1116, %v1117
    %v1119 = vrot.slane %v1112, 6
    %v1120 = vsel %vm401, %v1117, %v1119
    %1121 = vrot.lane.b32.xlu0 %v1118, 64
    %v1122 = vpop.permute.xlu0 %1121
    %1123 = vrot.lane.b32.xlu0 %v1120, 64
    %v1124 = vpop.permute.xlu0 %1123
    %v1127 = vadd.f32 %v1076, %v1122
    %v1128 = vadd.f32 %v1077, %v1124
    %v1130 = vlaneseq
    %v1131 = vshrl.u32 %v1130, 7
    %v1132 = vsub.s32 0, %v1131
    %v1133 = vrot.slane %v795, %v1132
    %v1135 = vadd.f32 %v1127, %v1133
    %v1136 = vadd.f32 %v1128, %v1133
    %v1137 = vadd.f32 %v1135, %v423
    %v1138 = vadd.f32 %v1136, %v424
    %v1139 = vmax.f32 %v1137, 0.0
    %v1140 = vmax.f32 %v1138, 0.0
    %s1141 = scalar_lea.vmem %s4, 192
    %v1142 = vld [vmem:[%s1141] sm:$0xff]
    %v1143 = vld [vmem:[%s1141 + $0x8] sm:$0xff]
    %v1144 = vld [vmem:[%s1141 + $0x10] sm:$0xff]
    %v1145 = vld [vmem:[%s1141 + $0x18] sm:$0xff]
    %v1146 = vld [vmem:[%s1141 + $0x20] sm:$0xff]
    %v1147 = vld [vmem:[%s1141 + $0x28] sm:$0xff]
    %v1148 = vld [vmem:[%s1141 + $0x30] sm:$0xff]
    %v1149 = vld [vmem:[%s1141 + $0x38] sm:$0xff]
    %v1150 = vld [vmem:[%s1141 + $0x40] sm:$0xff]
    %v1151 = vld [vmem:[%s1141 + $0x48] sm:$0xff]
    %v1152 = vld [vmem:[%s1141 + $0x50] sm:$0xff]
    %v1153 = vld [vmem:[%s1141 + $0x58] sm:$0xff]
    %s1154 = scalar_lea.vmem %s5, 2
    %v1155 = vld [vmem:[%s1154] sm:$0x1]
    %v1157 = vsel %vm48, %v1139, 0
    %v1160 = vsel %vm48, %v1140, 0
    %1162 = vmatprep.subr.mxu0 %v1143
    %1163 = vmatpush1.msra.mxu0 %v1142
    %1164 = vmatprep.subr.mxu0 %v1146
    %1165 = vmatpush1.msra.mxu0 %v1145
    %1166 = vmatprep.subr.mxu0 %v1149
    %1167 = vmatpush1.msra.mxu0 %v1148
    %1168 = vmatprep.subr.mxu0 %v1152
    %1169 = vmatpush1.msra.mxu0 %v1151
    %1170 = vmatprep.subr.mxu0 0.0
    %1171 = vmatpush1.msra.mxu0 0.0
    %1172 = vmatprep.subr.mxu0 0.0
    %1173 = vmatpush1.msra.mxu0 0.0
    %1174 = vmatprep.subr.mxu0 0.0
    %1175 = vmatpush1.msra.mxu0 0.0
    %1176 = vmatprep.subr.mxu0 0.0
    %1177 = vmatpush1.msra.mxu0 0.0
    %1178 = vmatprep.subr.mxu0 0.0
    %1179 = vmatpush1.msra.mxu0 0.0
    %1180 = vmatprep.subr.mxu0 0.0
    %1181 = vmatpush1.msra.mxu0 0.0
    %1182 = vmatprep.subr.mxu0 0.0
    %1183 = vmatpush1.msra.mxu0 0.0
    %1184 = vmatprep.subr.mxu0 0.0
    %1185 = vmatpush1.msra.mxu0 0.0
    %1186 = vmatprep.subr.mxu0 0.0
    %1187 = vmatpush1.msra.mxu0 0.0
    %1188 = vmatprep.subr.mxu0 0.0
    %1189 = vmatpush1.msra.mxu0 0.0
    %1190 = vmatprep.subr.mxu0 0.0
    %1191 = vmatpush1.msra.mxu0 0.0
    %1192 = vmatprep.subr.mxu0 0.0
    %1193 = vmatpush1.msra.mxu0 0.0
    %1194 = vmatprep.subr.mxu0 0.0
    %1195 = vmatpush1.msra.mxu0 0.0
    %1196 = vmatprep.subr.mxu0 0.0
    %1197 = vmatpush1.msra.mxu0 0.0
    %1198 = vmatprep.subr.mxu0 0.0
    %1199 = vmatpush1.msra.mxu0 0.0
    %1200 = vmatprep.subr.mxu0 0.0
    %1201 = vmatpush1.msra.mxu0 0.0
    %1202 = vmatprep.subr.mxu0 0.0
    %1203 = vmatpush1.msra.mxu0 0.0
    %1204 = vmatprep.subr.mxu0 0.0
    %1205 = vmatpush1.msra.mxu0 0.0
    %1206 = vmatprep.subr.mxu0 0.0
    %1207 = vmatpush1.msra.mxu0 0.0
    %1208 = vmatprep.subr.mxu0 0.0
    %1209 = vmatpush1.msra.mxu0 0.0
    %1210 = vmatprep.subr.mxu0 0.0
    %1211 = vmatpush1.msra.mxu0 0.0
    %1212 = vmatprep.subr.mxu0 0.0
    %1213 = vmatpush1.msra.mxu0 0.0
    %1214 = vmatprep.subr.mxu0 0.0
    %1215 = vmatpush1.msra.mxu0 0.0
    %1216 = vmatprep.subr.mxu0 0.0
    %1217 = vmatpush1.msra.mxu0 0.0
    %1218 = vmatprep.subr.mxu0 0.0
    %1219 = vmatpush1.msra.mxu0 0.0
    %1220 = vmatprep.subr.mxu0 0.0
    %1221 = vmatpush1.msra.mxu0 0.0
    %1222 = vmatprep.subr.mxu0 0.0
    %1223 = vmatpush1.msra.mxu0 0.0
    %1224 = vmatprep.subr.mxu0 0.0
    %1225 = vmatpush1.msra.mxu0 0.0
    %1226 = vmatprep.mubr.f32.mxu0 0.0
    %1227 = vmatmul.mubr.f32.gmra.mrb[0].mxu0 %v1157
    %v1228 = vpop.f32.mrb[0].mxu0
    %v1229 = vadd.f32 0.0, %v1228
    %v1230 = vpop.f32.mrb[0].mxu0
    %v1231 = vadd.f32 0.0, %v1230
    %1232 = vmatprep.mubr.f32.mxu0 0.0
    %1233 = vmatmul.mubr.f32.gmra.mrb[0].mxu0 %v1160
    %v1234 = vpop.f32.mrb[0].mxu0
    %v1235 = vadd.f32 0.0, %v1234
    %v1236 = vpop.f32.mrb[0].mxu0
    %v1237 = vadd.f32 0.0, %v1236
    %1238 = vdwg.mxu0
    %1239 = vmatprep.subr.mxu0 0.0
    %1240 = vmatpush1.msra.mxu0 %v1144
    %1241 = vmatprep.subr.mxu0 0.0
    %1242 = vmatpush1.msra.mxu0 %v1147
    %1243 = vmatprep.subr.mxu0 0.0
    %1244 = vmatpush1.msra.mxu0 %v1150
    %1245 = vmatprep.subr.mxu0 0.0
    %1246 = vmatpush1.msra.mxu0 %v1153
    %1247 = vmatprep.subr.mxu0 0.0
    %1248 = vmatpush1.msra.mxu0 0.0
    %1249 = vmatprep.subr.mxu0 0.0
    %1250 = vmatpush1.msra.mxu0 0.0
    %1251 = vmatprep.subr.mxu0 0.0
    %1252 = vmatpush1.msra.mxu0 0.0
    %1253 = vmatprep.subr.mxu0 0.0
    %1254 = vmatpush1.msra.mxu0 0.0
    %1255 = vmatprep.subr.mxu0 0.0
    %1256 = vmatpush1.msra.mxu0 0.0
    %1257 = vmatprep.subr.mxu0 0.0
    %1258 = vmatpush1.msra.mxu0 0.0
    %1259 = vmatprep.subr.mxu0 0.0
    %1260 = vmatpush1.msra.mxu0 0.0
    %1261 = vmatprep.subr.mxu0 0.0
    %1262 = vmatpush1.msra.mxu0 0.0
    %1263 = vmatprep.subr.mxu0 0.0
    %1264 = vmatpush1.msra.mxu0 0.0
    %1265 = vmatprep.subr.mxu0 0.0
    %1266 = vmatpush1.msra.mxu0 0.0
    %1267 = vmatprep.subr.mxu0 0.0
    %1268 = vmatpush1.msra.mxu0 0.0
    %1269 = vmatprep.subr.mxu0 0.0
    %1270 = vmatpush1.msra.mxu0 0.0
    %1271 = vmatprep.subr.mxu0 0.0
    %1272 = vmatpush1.msra.mxu0 0.0
    %1273 = vmatprep.subr.mxu0 0.0
    %1274 = vmatpush1.msra.mxu0 0.0
    %1275 = vmatprep.subr.mxu0 0.0
    %1276 = vmatpush1.msra.mxu0 0.0
    %1277 = vmatprep.subr.mxu0 0.0
    %1278 = vmatpush1.msra.mxu0 0.0
    %1279 = vmatprep.subr.mxu0 0.0
    %1280 = vmatpush1.msra.mxu0 0.0
    %1281 = vmatprep.subr.mxu0 0.0
    %1282 = vmatpush1.msra.mxu0 0.0
    %1283 = vmatprep.subr.mxu0 0.0
    %1284 = vmatpush1.msra.mxu0 0.0
    %1285 = vmatprep.subr.mxu0 0.0
    %1286 = vmatpush1.msra.mxu0 0.0
    %1287 = vmatprep.subr.mxu0 0.0
    %1288 = vmatpush1.msra.mxu0 0.0
    %1289 = vmatprep.subr.mxu0 0.0
    %1290 = vmatpush1.msra.mxu0 0.0
    %1291 = vmatprep.subr.mxu0 0.0
    %1292 = vmatpush1.msra.mxu0 0.0
    %1293 = vmatprep.subr.mxu0 0.0
    %1294 = vmatpush1.msra.mxu0 0.0
    %1295 = vmatprep.subr.mxu0 0.0
    %1296 = vmatpush1.msra.mxu0 0.0
    %1297 = vmatprep.subr.mxu0 0.0
    %1298 = vmatpush1.msra.mxu0 0.0
    %1299 = vmatprep.subr.mxu0 0.0
    %1300 = vmatpush1.msra.mxu0 0.0
    %1301 = vmatprep.subr.mxu0 0.0
    %1302 = vmatpush1.msra.mxu0 0.0
    %1303 = vmatprep.mubr.f32.mxu0 0.0
    %1304 = vmatmul.mubr.f32.gmra.mrb[0].mxu0 %v1157
    %v1305 = vpop.f32.mrb[0].mxu0
    %v1306 = vadd.f32 0.0, %v1305
    %v1307 = vpop.f32.mrb[0].mxu0
    %1308 = vmatprep.mubr.f32.mxu0 0.0
    %1309 = vmatmul.mubr.f32.gmra.mrb[0].mxu0 %v1160
    %v1310 = vpop.f32.mrb[0].mxu0
    %v1311 = vadd.f32 0.0, %v1310
    %v1312 = vpop.f32.mrb[0].mxu0
    %1313 = vdwg.mxu0
    %v1314 = vld [vmem:[%s1] sm:$0xff]
    %v1315 = vld [vmem:[%s1 + $0x8] sm:$0xff]
    %v1316 = vld [vmem:[%s1 + $0x10] sm:$0xff]
    %v1317 = vld [vmem:[%s1 + $0x18] sm:$0xf]
    %v1318 = vld [vmem:[%s1 + $0x20] sm:$0xf]
    %v1319 = vld [vmem:[%s1 + $0x28] sm:$0xf]
    %v1320 = vmul.f32 %v1229, %v1314
    %v1321 = vmul.f32 %v1231, %v1315
    %v1322 = vmul.f32 %v1306, %v1316
    %v1323 = vmul.f32 %v1235, %v1317
    %v1324 = vmul.f32 %v1237, %v1318
    %v1325 = vmul.f32 %v1311, %v1319
    %v1332 = vrot.slane %v1320, 4
    %v1333 = vrot.slane %v1321, 4
    %v1334 = vrot.slane %v1322, 4
    %v1335 = vrot.slane %v1323, 4
    %v1336 = vsel %vm73, %v1332, %v1335
    %v1337 = vrot.slane %v1324, 4
    %v1338 = vsel %vm73, %v1333, %v1337
    %v1339 = vrot.slane %v1325, 4
    %v1340 = vsel %vm73, %v1334, %v1339
    %1347 = vst [vmem:[#allocation2] sm:$0xf0] %v1332
    %1348 = vst [vmem:[#allocation2 + $0x8] sm:$0xf0] %v1333
    %1349 = vst.msk [vmem:[#allocation2 + $0x10] sm:$0xf0] %vm270, %v1334
    %1350 = vst [vmem:[#allocation2 + $0x18] sm:$0xff] %v1336
    %1351 = vst [vmem:[#allocation2 + $0x20] sm:$0xff] %v1338
    %1352 = vst.msk [vmem:[#allocation2 + $0x28] sm:$0xff] %vm48, %v1340
    %v1353 = vld [vmem:[#allocation2] sm:$0xff]
    %v1354 = vld [vmem:[#allocation2 + $0x18] sm:$0xf]
    %v1355 = vld [vmem:[#allocation2] sm:$0xfe]
    %v1356 = vld [vmem:[#allocation2 + $0x18] sm:$0x1f]
    %v1357 = vld [vmem:[#allocation2] sm:$0xfc]
    %v1358 = vld [vmem:[#allocation2 + $0x18] sm:$0x3f]
    %v1359 = vld [vmem:[#allocation2] sm:$0xf8]
    %v1360 = vld [vmem:[#allocation2 + $0x18] sm:$0x7f]
    %v1361 = vld [vmem:[#allocation2 + $0x8] sm:$0xf0]
    %v1362 = vld [vmem:[#allocation2 + $0x20] sm:$0xff]
    %v1363 = vld [vmem:[#allocation2 + $0x8] sm:$0xe0]
    %v1364 = vld [vmem:[#allocation2 + $0x38] sm:$0x1]
    %v1365 = vld [vmem:[#allocation2 + $0x8] sm:$0xc0]
    %v1366 = vld [vmem:[#allocation2 + $0x38] sm:$0x3]
    %v1367 = vld [vmem:[#allocation2 + $0x8] sm:$0x80]
    %v1368 = vld [vmem:[#allocation2 + $0x38] sm:$0x7]
    %v1369 = vld [vmem:[#allocation2 + $0x28] sm:$0xff]
    %v1370 = vld [vmem:[#allocation2 + $0x40] sm:$0xf]
    %v1373 = vrot.slane %v1355, 1
    %v1374 = vrot.slane %v1356, 1
    %v1375 = vsel %vm295, %v1373, %v1374
    %1376 = vrot.lane.b32.xlu0 %v1375, 96
    %v1377 = vpop.permute.xlu0 %1376
    %1378 = vrot.lane.b32.xlu0 %v1374, 96
    %v1379 = vpop.permute.xlu0 %1378
    %v1382 = vadd.f32 %v1353, %v1377
    %v1383 = vadd.f32 %v1354, %v1379
    %v1386 = vrot.slane %v1357, 2
    %v1387 = vrot.slane %v1358, 2
    %v1388 = vsel %vm309, %v1386, %v1387
    %1389 = vrot.lane.b32.xlu0 %v1388, 64
    %v1390 = vpop.permute.xlu0 %1389
    %1391 = vrot.lane.b32.xlu0 %v1387, 64
    %v1392 = vpop.permute.xlu0 %1391
    %v1395 = vadd.f32 %v1382, %v1390
    %v1396 = vadd.f32 %v1383, %v1392
    %v1399 = vrot.slane %v1361, 1
    %v1400 = vrot.slane %v1362, 1
    %v1401 = vsel %vm295, %v1399, %v1400
    %1402 = vrot.lane.b32.xlu0 %v1401, 96
    %v1403 = vpop.permute.xlu0 %1402
    %1404 = vrot.lane.b32.xlu0 %v1400, 96
    %v1405 = vpop.permute.xlu0 %1404
    %v1408 = vadd.f32 %v1359, %v1403
    %v1409 = vadd.f32 %v1360, %v1405
    %v1412 = vrot.slane %v1363, 2
    %v1413 = vrot.slane %v1362, 2
    %v1414 = vsel %vm309, %v1412, %v1413
    %v1415 = vrot.slane %v1364, 2
    %v1416 = vsel %vm309, %v1413, %v1415
    %1417 = vrot.lane.b32.xlu0 %v1414, 64
    %v1418 = vpop.permute.xlu0 %1417
    %1419 = vrot.lane.b32.xlu0 %v1416, 64
    %v1420 = vpop.permute.xlu0 %1419
    %v1423 = vadd.f32 %v1408, %v1418
    %v1424 = vadd.f32 %v1409, %v1420
    %v1427 = vrot.slane %v1423, 3
    %v1428 = vrot.slane %v1424, 3
    %v1429 = vsel %vm351, %v1427, %v1428
    %1430 = vrot.lane.b32.xlu0 %v1429, 32
    %v1431 = vpop.permute.xlu0 %1430
    %1432 = vrot.lane.b32.xlu0 %v1428, 32
    %v1433 = vpop.permute.xlu0 %1432
    %v1436 = vadd.f32 %v1395, %v1431
    %v1437 = vadd.f32 %v1396, %v1433
    %v1440 = vrot.slane %v1367, 1
    %v1441 = vsel %vm295, %v1440, %v1400
    %v1442 = vrot.slane %v1368, 1
    %v1443 = vsel %vm295, %v1400, %v1442
    %1444 = vrot.lane.b32.xlu0 %v1441, 96
    %v1445 = vpop.permute.xlu0 %1444
    %1446 = vrot.lane.b32.xlu0 %v1443, 96
    %v1447 = vpop.permute.xlu0 %1446
    %1448 = vrot.lane.b32.xlu0 %v1442, 96
    %v1449 = vpop.permute.xlu0 %1448
    %v1453 = vadd.f32 %v1365, %v1445
    %v1454 = vadd.f32 %v1362, %v1447
    %v1455 = vadd.f32 %v1366, %v1449
    %v1458 = vrot.slane %v1369, 2
    %v1459 = vrot.slane %v1370, 2
    %v1460 = vsel %vm309, %v1458, %v1459
    %1461 = vrot.lane.b32.xlu0 %v1458, 64
    %v1462 = vpop.permute.xlu0 %1461
    %1463 = vrot.lane.b32.xlu0 %v1460, 64
    %v1464 = vpop.permute.xlu0 %1463
    %1465 = vrot.lane.b32.xlu0 %v1459, 64
    %v1466 = vpop.permute.xlu0 %1465
    %v1470 = vadd.f32 %v1453, %v1462
    %v1471 = vadd.f32 %v1454, %v1464
    %v1472 = vadd.f32 %v1455, %v1466
    %v1476 = vrot.slane %v1470, 6
    %v1477 = vrot.slane %v1471, 6
    %v1478 = vsel %vm401, %v1476, %v1477
    %v1479 = vrot.slane %v1472, 6
    %v1480 = vsel %vm401, %v1477, %v1479
    %1481 = vrot.lane.b32.xlu0 %v1478, 64
    %v1482 = vpop.permute.xlu0 %1481
    %1483 = vrot.lane.b32.xlu0 %v1480, 64
    %v1484 = vpop.permute.xlu0 %1483
    %v1487 = vadd.f32 %v1436, %v1482
    %v1488 = vadd.f32 %v1437, %v1484
    %v1490 = vlaneseq
    %v1491 = vshrl.u32 %v1490, 7
    %v1492 = vsub.s32 0, %v1491
    %v1493 = vrot.slane %v1155, %v1492
    %v1495 = vadd.f32 %v1487, %v1493
    %v1496 = vadd.f32 %v1488, %v1493
    %v1497 = vmax.f32 %v1495, 0.0
    %v1498 = vmax.f32 %v1496, 0.0
    %s1499 = scalar_lea.vmem %s4, 288
    %v1500 = vld [vmem:[%s1499] sm:$0xff]
    %v1501 = vld [vmem:[%s1499 + $0x8] sm:$0xff]
    %v1502 = vld [vmem:[%s1499 + $0x10] sm:$0xff]
    %v1503 = vld [vmem:[%s1499 + $0x18] sm:$0xff]
    %v1504 = vld [vmem:[%s1499 + $0x20] sm:$0xff]
    %v1505 = vld [vmem:[%s1499 + $0x28] sm:$0xff]
    %v1506 = vld [vmem:[%s1499 + $0x30] sm:$0xff]
    %v1507 = vld [vmem:[%s1499 + $0x38] sm:$0xff]
    %v1508 = vld [vmem:[%s1499 + $0x40] sm:$0xff]
    %v1509 = vld [vmem:[%s1499 + $0x48] sm:$0xff]
    %v1510 = vld [vmem:[%s1499 + $0x50] sm:$0xff]
    %v1511 = vld [vmem:[%s1499 + $0x58] sm:$0xff]
    %s1512 = scalar_lea.vmem %s5, 3
    %v1513 = vld [vmem:[%s1512] sm:$0x1]
    %v1515 = vsel %vm48, %v1497, 0
    %v1518 = vsel %vm48, %v1498, 0
    %1520 = vmatprep.subr.mxu0 %v1501
    %1521 = vmatpush1.msra.mxu0 %v1500
    %1522 = vmatprep.subr.mxu0 %v1504
    %1523 = vmatpush1.msra.mxu0 %v1503
    %1524 = vmatprep.subr.mxu0 %v1507
    %1525 = vmatpush1.msra.mxu0 %v1506
    %1526 = vmatprep.subr.mxu0 %v1510
    %1527 = vmatpush1.msra.mxu0 %v1509
    %1528 = vmatprep.subr.mxu0 0.0
    %1529 = vmatpush1.msra.mxu0 0.0
    %1530 = vmatprep.subr.mxu0 0.0
    %1531 = vmatpush1.msra.mxu0 0.0
    %1532 = vmatprep.subr.mxu0 0.0
    %1533 = vmatpush1.msra.mxu0 0.0
    %1534 = vmatprep.subr.mxu0 0.0
    %1535 = vmatpush1.msra.mxu0 0.0
    %1536 = vmatprep.subr.mxu0 0.0
    %1537 = vmatpush1.msra.mxu0 0.0
    %1538 = vmatprep.subr.mxu0 0.0
    %1539 = vmatpush1.msra.mxu0 0.0
    %1540 = vmatprep.subr.mxu0 0.0
    %1541 = vmatpush1.msra.mxu0 0.0
    %1542 = vmatprep.subr.mxu0 0.0
    %1543 = vmatpush1.msra.mxu0 0.0
    %1544 = vmatprep.subr.mxu0 0.0
    %1545 = vmatpush1.msra.mxu0 0.0
    %1546 = vmatprep.subr.mxu0 0.0
    %1547 = vmatpush1.msra.mxu0 0.0
    %1548 = vmatprep.subr.mxu0 0.0
    %1549 = vmatpush1.msra.mxu0 0.0
    %1550 = vmatprep.subr.mxu0 0.0
    %1551 = vmatpush1.msra.mxu0 0.0
    %1552 = vmatprep.subr.mxu0 0.0
    %1553 = vmatpush1.msra.mxu0 0.0
    %1554 = vmatprep.subr.mxu0 0.0
    %1555 = vmatpush1.msra.mxu0 0.0
    %1556 = vmatprep.subr.mxu0 0.0
    %1557 = vmatpush1.msra.mxu0 0.0
    %1558 = vmatprep.subr.mxu0 0.0
    %1559 = vmatpush1.msra.mxu0 0.0
    %1560 = vmatprep.subr.mxu0 0.0
    %1561 = vmatpush1.msra.mxu0 0.0
    %1562 = vmatprep.subr.mxu0 0.0
    %1563 = vmatpush1.msra.mxu0 0.0
    %1564 = vmatprep.subr.mxu0 0.0
    %1565 = vmatpush1.msra.mxu0 0.0
    %1566 = vmatprep.subr.mxu0 0.0
    %1567 = vmatpush1.msra.mxu0 0.0
    %1568 = vmatprep.subr.mxu0 0.0
    %1569 = vmatpush1.msra.mxu0 0.0
    %1570 = vmatprep.subr.mxu0 0.0
    %1571 = vmatpush1.msra.mxu0 0.0
    %1572 = vmatprep.subr.mxu0 0.0
    %1573 = vmatpush1.msra.mxu0 0.0
    %1574 = vmatprep.subr.mxu0 0.0
    %1575 = vmatpush1.msra.mxu0 0.0
    %1576 = vmatprep.subr.mxu0 0.0
    %1577 = vmatpush1.msra.mxu0 0.0
    %1578 = vmatprep.subr.mxu0 0.0
    %1579 = vmatpush1.msra.mxu0 0.0
    %1580 = vmatprep.subr.mxu0 0.0
    %1581 = vmatpush1.msra.mxu0 0.0
    %1582 = vmatprep.subr.mxu0 0.0
    %1583 = vmatpush1.msra.mxu0 0.0
    %1584 = vmatprep.mubr.f32.mxu0 0.0
    %1585 = vmatmul.mubr.f32.gmra.mrb[0].mxu0 %v1515
    %v1586 = vpop.f32.mrb[0].mxu0
    %v1587 = vadd.f32 0.0, %v1586
    %v1588 = vpop.f32.mrb[0].mxu0
    %v1589 = vadd.f32 0.0, %v1588
    %1590 = vmatprep.mubr.f32.mxu0 0.0
    %1591 = vmatmul.mubr.f32.gmra.mrb[0].mxu0 %v1518
    %v1592 = vpop.f32.mrb[0].mxu0
    %v1593 = vadd.f32 0.0, %v1592
    %v1594 = vpop.f32.mrb[0].mxu0
    %v1595 = vadd.f32 0.0, %v1594
    %1596 = vdwg.mxu0
    %1597 = vmatprep.subr.mxu0 0.0
    %1598 = vmatpush1.msra.mxu0 %v1502
    %1599 = vmatprep.subr.mxu0 0.0
    %1600 = vmatpush1.msra.mxu0 %v1505
    %1601 = vmatprep.subr.mxu0 0.0
    %1602 = vmatpush1.msra.mxu0 %v1508
    %1603 = vmatprep.subr.mxu0 0.0
    %1604 = vmatpush1.msra.mxu0 %v1511
    %1605 = vmatprep.subr.mxu0 0.0
    %1606 = vmatpush1.msra.mxu0 0.0
    %1607 = vmatprep.subr.mxu0 0.0
    %1608 = vmatpush1.msra.mxu0 0.0
    %1609 = vmatprep.subr.mxu0 0.0
    %1610 = vmatpush1.msra.mxu0 0.0
    %1611 = vmatprep.subr.mxu0 0.0
    %1612 = vmatpush1.msra.mxu0 0.0
    %1613 = vmatprep.subr.mxu0 0.0
    %1614 = vmatpush1.msra.mxu0 0.0
    %1615 = vmatprep.subr.mxu0 0.0
    %1616 = vmatpush1.msra.mxu0 0.0
    %1617 = vmatprep.subr.mxu0 0.0
    %1618 = vmatpush1.msra.mxu0 0.0
    %1619 = vmatprep.subr.mxu0 0.0
    %1620 = vmatpush1.msra.mxu0 0.0
    %1621 = vmatprep.subr.mxu0 0.0
    %1622 = vmatpush1.msra.mxu0 0.0
    %1623 = vmatprep.subr.mxu0 0.0
    %1624 = vmatpush1.msra.mxu0 0.0
    %1625 = vmatprep.subr.mxu0 0.0
    %1626 = vmatpush1.msra.mxu0 0.0
    %1627 = vmatprep.subr.mxu0 0.0
    %1628 = vmatpush1.msra.mxu0 0.0
    %1629 = vmatprep.subr.mxu0 0.0
    %1630 = vmatpush1.msra.mxu0 0.0
    %1631 = vmatprep.subr.mxu0 0.0
    %1632 = vmatpush1.msra.mxu0 0.0
    %1633 = vmatprep.subr.mxu0 0.0
    %1634 = vmatpush1.msra.mxu0 0.0
    %1635 = vmatprep.subr.mxu0 0.0
    %1636 = vmatpush1.msra.mxu0 0.0
    %1637 = vmatprep.subr.mxu0 0.0
    %1638 = vmatpush1.msra.mxu0 0.0
    %1639 = vmatprep.subr.mxu0 0.0
    %1640 = vmatpush1.msra.mxu0 0.0
    %1641 = vmatprep.subr.mxu0 0.0
    %1642 = vmatpush1.msra.mxu0 0.0
    %1643 = vmatprep.subr.mxu0 0.0
    %1644 = vmatpush1.msra.mxu0 0.0
    %1645 = vmatprep.subr.mxu0 0.0
    %1646 = vmatpush1.msra.mxu0 0.0
    %1647 = vmatprep.subr.mxu0 0.0
    %1648 = vmatpush1.msra.mxu0 0.0
    %1649 = vmatprep.subr.mxu0 0.0
    %1650 = vmatpush1.msra.mxu0 0.0
    %1651 = vmatprep.subr.mxu0 0.0
    %1652 = vmatpush1.msra.mxu0 0.0
    %1653 = vmatprep.subr.mxu0 0.0
    %1654 = vmatpush1.msra.mxu0 0.0
    %1655 = vmatprep.subr.mxu0 0.0
    %1656 = vmatpush1.msra.mxu0 0.0
    %1657 = vmatprep.subr.mxu0 0.0
    %1658 = vmatpush1.msra.mxu0 0.0
    %1659 = vmatprep.subr.mxu0 0.0
    %1660 = vmatpush1.msra.mxu0 0.0
    %1661 = vmatprep.mubr.f32.mxu0 0.0
    %1662 = vmatmul.mubr.f32.gmra.mrb[0].mxu0 %v1515
    %v1663 = vpop.f32.mrb[0].mxu0
    %v1664 = vadd.f32 0.0, %v1663
    %v1665 = vpop.f32.mrb[0].mxu0
    %1666 = vmatprep.mubr.f32.mxu0 0.0
    %1667 = vmatmul.mubr.f32.gmra.mrb[0].mxu0 %v1518
    %v1668 = vpop.f32.mrb[0].mxu0
    %v1669 = vadd.f32 0.0, %v1668
    %v1670 = vpop.f32.mrb[0].mxu0
    %1671 = vdwg.mxu0
    %v1672 = vld [vmem:[%s1] sm:$0xff]
    %v1673 = vld [vmem:[%s1 + $0x8] sm:$0xff]
    %v1674 = vld [vmem:[%s1 + $0x10] sm:$0xff]
    %v1675 = vld [vmem:[%s1 + $0x18] sm:$0xf]
    %v1676 = vld [vmem:[%s1 + $0x20] sm:$0xf]
    %v1677 = vld [vmem:[%s1 + $0x28] sm:$0xf]
    %v1678 = vmul.f32 %v1587, %v1672
    %v1679 = vmul.f32 %v1589, %v1673
    %v1680 = vmul.f32 %v1664, %v1674
    %v1681 = vmul.f32 %v1593, %v1675
    %v1682 = vmul.f32 %v1595, %v1676
    %v1683 = vmul.f32 %v1669, %v1677
    %v1690 = vrot.slane %v1678, 4
    %v1691 = vrot.slane %v1679, 4
    %v1692 = vrot.slane %v1680, 4
    %v1693 = vrot.slane %v1681, 4
    %v1694 = vsel %vm73, %v1690, %v1693
    %v1695 = vrot.slane %v1682, 4
    %v1696 = vsel %vm73, %v1691, %v1695
    %v1697 = vrot.slane %v1683, 4
    %v1698 = vsel %vm73, %v1692, %v1697
    %1705 = vst [vmem:[#allocation2] sm:$0xf0] %v1690
    %1706 = vst [vmem:[#allocation2 + $0x8] sm:$0xf0] %v1691
    %1707 = vst.msk [vmem:[#allocation2 + $0x10] sm:$0xf0] %vm270, %v1692
    %1708 = vst [vmem:[#allocation2 + $0x18] sm:$0xff] %v1694
    %1709 = vst [vmem:[#allocation2 + $0x20] sm:$0xff] %v1696
    %1710 = vst.msk [vmem:[#allocation2 + $0x28] sm:$0xff] %vm48, %v1698
    %v1711 = vld [vmem:[#allocation2] sm:$0xff]
    %v1712 = vld [vmem:[#allocation2 + $0x18] sm:$0xf]
    %v1713 = vld [vmem:[#allocation2] sm:$0xfe]
    %v1714 = vld [vmem:[#allocation2 + $0x18] sm:$0x1f]
    %v1715 = vld [vmem:[#allocation2] sm:$0xfc]
    %v1716 = vld [vmem:[#allocation2 + $0x18] sm:$0x3f]
    %v1717 = vld [vmem:[#allocation2] sm:$0xf8]
    %v1718 = vld [vmem:[#allocation2 + $0x18] sm:$0x7f]
    %v1719 = vld [vmem:[#allocation2 + $0x8] sm:$0xf0]
    %v1720 = vld [vmem:[#allocation2 + $0x20] sm:$0xff]
    %v1721 = vld [vmem:[#allocation2 + $0x8] sm:$0xe0]
    %v1722 = vld [vmem:[#allocation2 + $0x38] sm:$0x1]
    %v1723 = vld [vmem:[#allocation2 + $0x8] sm:$0xc0]
    %v1724 = vld [vmem:[#allocation2 + $0x38] sm:$0x3]
    %v1725 = vld [vmem:[#allocation2 + $0x8] sm:$0x80]
    %v1726 = vld [vmem:[#allocation2 + $0x38] sm:$0x7]
    %v1727 = vld [vmem:[#allocation2 + $0x28] sm:$0xff]
    %v1728 = vld [vmem:[#allocation2 + $0x40] sm:$0xf]
    %v1731 = vrot.slane %v1713, 1
    %v1732 = vrot.slane %v1714, 1
    %v1733 = vsel %vm295, %v1731, %v1732
    %1734 = vrot.lane.b32.xlu0 %v1733, 96
    %v1735 = vpop.permute.xlu0 %1734
    %1736 = vrot.lane.b32.xlu0 %v1732, 96
    %v1737 = vpop.permute.xlu0 %1736
    %v1740 = vadd.f32 %v1711, %v1735
    %v1741 = vadd.f32 %v1712, %v1737
    %v1744 = vrot.slane %v1715, 2
    %v1745 = vrot.slane %v1716, 2
    %v1746 = vsel %vm309, %v1744, %v1745
    %1747 = vrot.lane.b32.xlu0 %v1746, 64
    %v1748 = vpop.permute.xlu0 %1747
    %1749 = vrot.lane.b32.xlu0 %v1745, 64
    %v1750 = vpop.permute.xlu0 %1749
    %v1753 = vadd.f32 %v1740, %v1748
    %v1754 = vadd.f32 %v1741, %v1750
    %v1757 = vrot.slane %v1719, 1
    %v1758 = vrot.slane %v1720, 1
    %v1759 = vsel %vm295, %v1757, %v1758
    %1760 = vrot.lane.b32.xlu0 %v1759, 96
    %v1761 = vpop.permute.xlu0 %1760
    %1762 = vrot.lane.b32.xlu0 %v1758, 96
    %v1763 = vpop.permute.xlu0 %1762
    %v1766 = vadd.f32 %v1717, %v1761
    %v1767 = vadd.f32 %v1718, %v1763
    %v1770 = vrot.slane %v1721, 2
    %v1771 = vrot.slane %v1720, 2
    %v1772 = vsel %vm309, %v1770, %v1771
    %v1773 = vrot.slane %v1722, 2
    %v1774 = vsel %vm309, %v1771, %v1773
    %1775 = vrot.lane.b32.xlu0 %v1772, 64
    %v1776 = vpop.permute.xlu0 %1775
    %1777 = vrot.lane.b32.xlu0 %v1774, 64
    %v1778 = vpop.permute.xlu0 %1777
    %v1781 = vadd.f32 %v1766, %v1776
    %v1782 = vadd.f32 %v1767, %v1778
    %v1785 = vrot.slane %v1781, 3
    %v1786 = vrot.slane %v1782, 3
    %v1787 = vsel %vm351, %v1785, %v1786
    %1788 = vrot.lane.b32.xlu0 %v1787, 32
    %v1789 = vpop.permute.xlu0 %1788
    %1790 = vrot.lane.b32.xlu0 %v1786, 32
    %v1791 = vpop.permute.xlu0 %1790
    %v1794 = vadd.f32 %v1753, %v1789
    %v1795 = vadd.f32 %v1754, %v1791
    %v1798 = vrot.slane %v1725, 1
    %v1799 = vsel %vm295, %v1798, %v1758
    %v1800 = vrot.slane %v1726, 1
    %v1801 = vsel %vm295, %v1758, %v1800
    %1802 = vrot.lane.b32.xlu0 %v1799, 96
    %v1803 = vpop.permute.xlu0 %1802
    %1804 = vrot.lane.b32.xlu0 %v1801, 96
    %v1805 = vpop.permute.xlu0 %1804
    %1806 = vrot.lane.b32.xlu0 %v1800, 96
    %v1807 = vpop.permute.xlu0 %1806
    %v1811 = vadd.f32 %v1723, %v1803
    %v1812 = vadd.f32 %v1720, %v1805
    %v1813 = vadd.f32 %v1724, %v1807
    %v1816 = vrot.slane %v1727, 2
    %v1817 = vrot.slane %v1728, 2
    %v1818 = vsel %vm309, %v1816, %v1817
    %1819 = vrot.lane.b32.xlu0 %v1816, 64
    %v1820 = vpop.permute.xlu0 %1819
    %1821 = vrot.lane.b32.xlu0 %v1818, 64
    %v1822 = vpop.permute.xlu0 %1821
    %1823 = vrot.lane.b32.xlu0 %v1817, 64
    %v1824 = vpop.permute.xlu0 %1823
    %v1828 = vadd.f32 %v1811, %v1820
    %v1829 = vadd.f32 %v1812, %v1822
    %v1830 = vadd.f32 %v1813, %v1824
    %v1834 = vrot.slane %v1828, 6
    %v1835 = vrot.slane %v1829, 6
    %v1836 = vsel %vm401, %v1834, %v1835
    %v1837 = vrot.slane %v1830, 6
    %v1838 = vsel %vm401, %v1835, %v1837
    %1839 = vrot.lane.b32.xlu0 %v1836, 64
    %v1840 = vpop.permute.xlu0 %1839
    %1841 = vrot.lane.b32.xlu0 %v1838, 64
    %v1842 = vpop.permute.xlu0 %1841
    %v1845 = vadd.f32 %v1794, %v1840
    %v1846 = vadd.f32 %v1795, %v1842
    %v1848 = vlaneseq
    %v1849 = vshrl.u32 %v1848, 7
    %v1850 = vsub.s32 0, %v1849
    %v1851 = vrot.slane %v1513, %v1850
    %v1853 = vadd.f32 %v1845, %v1851
    %v1854 = vadd.f32 %v1846, %v1851
    %v1855 = vadd.f32 %v1853, %v1139
    %v1856 = vadd.f32 %v1854, %v1140
    %v1857 = vmax.f32 %v1855, 0.0
    %v1858 = vmax.f32 %v1856, 0.0
    %v1859 = vld [vmem:[%s6] sm:$0xff]
    %v1860 = vld [vmem:[%s6 + $0x8] sm:$0xff]
    %v1861 = vld [vmem:[%s6 + $0x10] sm:$0xff]
    %v1862 = vld [vmem:[%s6 + $0x18] sm:$0xff]
    %v1863 = vld [vmem:[%s7] sm:$0x1]
    %v1865 = vlaneseq
    %v1866 = vshrl.u32 %v1865, 7
    %v1867 = vsub.s32 0, %v1866
    %v1868 = vrot.slane %v1863, %v1867
    %v1871 = vsel %vm48, %v1857, 0
    %v1874 = vsel %vm48, %v1858, 0
    %1876 = vmatprep.subr.mxu0 0.0
    %1877 = vmatpush1.msra.mxu0 %v1859
    %1878 = vmatprep.subr.mxu0 0.0
    %1879 = vmatpush1.msra.mxu0 %v1860
    %1880 = vmatprep.subr.mxu0 0.0
    %1881 = vmatpush1.msra.mxu0 %v1861
    %1882 = vmatprep.subr.mxu0 0.0
    %1883 = vmatpush1.msra.mxu0 %v1862
    %1884 = vmatprep.subr.mxu0 0.0
    %1885 = vmatpush1.msra.mxu0 0.0
    %1886 = vmatprep.subr.mxu0 0.0
    %1887 = vmatpush1.msra.mxu0 0.0
    %1888 = vmatprep.subr.mxu0 0.0
    %1889 = vmatpush1.msra.mxu0 0.0
    %1890 = vmatprep.subr.mxu0 0.0
    %1891 = vmatpush1.msra.mxu0 0.0
    %1892 = vmatprep.subr.mxu0 0.0
    %1893 = vmatpush1.msra.mxu0 0.0
    %1894 = vmatprep.subr.mxu0 0.0
    %1895 = vmatpush1.msra.mxu0 0.0
    %1896 = vmatprep.subr.mxu0 0.0
    %1897 = vmatpush1.msra.mxu0 0.0
    %1898 = vmatprep.subr.mxu0 0.0
    %1899 = vmatpush1.msra.mxu0 0.0
    %1900 = vmatprep.subr.mxu0 0.0
    %1901 = vmatpush1.msra.mxu0 0.0
    %1902 = vmatprep.subr.mxu0 0.0
    %1903 = vmatpush1.msra.mxu0 0.0
    %1904 = vmatprep.subr.mxu0 0.0
    %1905 = vmatpush1.msra.mxu0 0.0
    %1906 = vmatprep.subr.mxu0 0.0
    %1907 = vmatpush1.msra.mxu0 0.0
    %1908 = vmatprep.subr.mxu0 0.0
    %1909 = vmatpush1.msra.mxu0 0.0
    %1910 = vmatprep.subr.mxu0 0.0
    %1911 = vmatpush1.msra.mxu0 0.0
    %1912 = vmatprep.subr.mxu0 0.0
    %1913 = vmatpush1.msra.mxu0 0.0
    %1914 = vmatprep.subr.mxu0 0.0
    %1915 = vmatpush1.msra.mxu0 0.0
    %1916 = vmatprep.subr.mxu0 0.0
    %1917 = vmatpush1.msra.mxu0 0.0
    %1918 = vmatprep.subr.mxu0 0.0
    %1919 = vmatpush1.msra.mxu0 0.0
    %1920 = vmatprep.subr.mxu0 0.0
    %1921 = vmatpush1.msra.mxu0 0.0
    %1922 = vmatprep.subr.mxu0 0.0
    %1923 = vmatpush1.msra.mxu0 0.0
    %1924 = vmatprep.subr.mxu0 0.0
    %1925 = vmatpush1.msra.mxu0 0.0
    %1926 = vmatprep.subr.mxu0 0.0
    %1927 = vmatpush1.msra.mxu0 0.0
    %1928 = vmatprep.subr.mxu0 0.0
    %1929 = vmatpush1.msra.mxu0 0.0
    %1930 = vmatprep.subr.mxu0 0.0
    %1931 = vmatpush1.msra.mxu0 0.0
    %1932 = vmatprep.subr.mxu0 0.0
    %1933 = vmatpush1.msra.mxu0 0.0
    %1934 = vmatprep.subr.mxu0 0.0
    %1935 = vmatpush1.msra.mxu0 0.0
    %1936 = vmatprep.subr.mxu0 0.0
    %1937 = vmatpush1.msra.mxu0 0.0
    %1938 = vmatprep.subr.mxu0 0.0
    %1939 = vmatpush1.msra.mxu0 0.0
    %1940 = vmatprep.mubr.f32.mxu0 0.0
    %1941 = vmatmul.mubr.f32.gmra.mrb[0].mxu0 %v1871
    %v1942 = vpop.f32.mrb[0].mxu0
    %v1943 = vadd.f32 %v1868, %v1942
    %v1944 = vpop.f32.mrb[0].mxu0
    %1945 = vmatprep.mubr.f32.mxu0 0.0
    %1946 = vmatmul.mubr.f32.gmra.mrb[0].mxu0 %v1874
    %v1947 = vpop.f32.mrb[0].mxu0
    %v1948 = vadd.f32 %v1868, %v1947
    %v1949 = vpop.f32.mrb[0].mxu0
    %1950 = vdwg.mxu0
    %v1951 = vmax.f32 %v1943, 0.0
    %v1952 = vmax.f32 %v1948, 0.0
    %v1953 = vlaneseq
    %vm1954 = vcmp.ge.s32.totalorder %v1953, 0
    %vm1955 = vcmp.lt.s32.totalorder %v1953, 32
    %vm1956 = vmand %vm1954, %vm1955
    %1957 = vst.msk [vmem:[#allocation3] sm:$0x1] %vm1956, %v1951
    %v1960 = vunpack.c.l.s4 1966171168
    %v1961 = vunpack.c.0.s8 %v1960
    %v1962 = vlaneseq
    %v1963 = vshrl.u32 %v1962, 7
    %v1964 = vsub.s32 %v1961, %v1963
    %v1965 = vrot.slane %v1951, %v1964
    %v1966 = vcombine.high %v1965, %v1965
    %v1968 = vunpack.c.l.s4 1966171168
    %v1969 = vunpack.c.0.s8 %v1968
    %v1970 = vlaneseq
    %v1971 = vshrl.u32 %v1970, 7
    %v1972 = vsub.s32 %v1969, %v1971
    %v1973 = vrot.slane %v1965, %v1972
    %v1975 = vunpack.c.l.s4 1966171168
    %v1976 = vunpack.c.0.s8 %v1975
    %v1977 = vlaneseq
    %v1978 = vshrl.u32 %v1977, 7
    %v1979 = vsub.s32 %v1976, %v1978
    %v1980 = vrot.slane %v1966, %v1979
    %1981 = vrot.lane.b32.xlu0 %v1980, 32
    %v1982 = vpop.permute.xlu0 %1981
    %vm1984 = vcmp.ge.s32.totalorder %v1953, 32
    %vm1985 = vcmp.lt.s32.totalorder %v1953, 64
    %vm1986 = vmand %vm1984, %vm1985
    %1987 = vst.msk [vmem:[#allocation3] sm:$0x1] %vm1986, %v1982
    %v1988 = vcombine.high %v1973, %v1973
    %1989 = vrot.lane.b32.xlu0 %v1988, 64
    %v1990 = vpop.permute.xlu0 %1989
    %vm1992 = vcmp.ge.s32.totalorder %v1953, 64
    %vm1993 = vcmp.lt.s32.totalorder %v1953, 96
    %vm1994 = vmand %vm1992, %vm1993
    %1995 = vst.msk [vmem:[#allocation3] sm:$0x1] %vm1994, %v1990
    %v1996 = vcombine.high %v1980, %v1980
    %1997 = vrot.lane.b32.xlu0 %v1996, 96
    %v1998 = vpop.permute.xlu0 %1997
    %vm2000 = vcmp.ge.s32.totalorder %v1953, 96
    %vm2001 = vcmp.lt.s32.totalorder %v1953, 128
    %vm2002 = vmand %vm2000, %vm2001
    %2003 = vst.msk [vmem:[#allocation3] sm:$0x1] %vm2002, %v1998
    %v2004 = vcombine.high %v1951, %v1951
    %v2006 = vunpack.c.l.s4 1966171168
    %v2007 = vunpack.c.0.s8 %v2006
    %v2008 = vlaneseq
    %v2009 = vshrl.u32 %v2008, 7
    %v2010 = vsub.s32 %v2007, %v2009
    %v2011 = vrot.slane %v2004, %v2010
    %v2013 = vunpack.c.l.s4 1966171168
    %v2014 = vunpack.c.0.s8 %v2013
    %v2015 = vlaneseq
    %v2016 = vshrl.u32 %v2015, 7
    %v2017 = vsub.s32 %v2014, %v2016
    %v2018 = vrot.slane %v2011, %v2017
    %2020 = vst.msk [vmem:[#allocation3 + $0x1] sm:$0x1] %vm1956, %v2018
    %v2021 = vcombine.high %v2011, %v2011
    %v2023 = vunpack.c.l.s4 1966171168
    %v2024 = vunpack.c.0.s8 %v2023
    %v2025 = vlaneseq
    %v2026 = vshrl.u32 %v2025, 7
    %v2027 = vsub.s32 %v2024, %v2026
    %v2028 = vrot.slane %v2021, %v2027
    %2029 = vrot.lane.b32.xlu0 %v2028, 32
    %v2030 = vpop.permute.xlu0 %2029
    %2032 = vst.msk [vmem:[#allocation3 + $0x1] sm:$0x1] %vm1986, %v2030
    %v2033 = vcombine.high %v2018, %v2018
    %2034 = vrot.lane.b32.xlu0 %v2033, 64
    %v2035 = vpop.permute.xlu0 %2034
    %2037 = vst.msk [vmem:[#allocation3 + $0x1] sm:$0x1] %vm1994, %v2035
    %v2038 = vcombine.high %v2028, %v2028
    %2039 = vrot.lane.b32.xlu0 %v2038, 96
    %v2040 = vpop.permute.xlu0 %2039
    %2042 = vst.msk [vmem:[#allocation3 + $0x1] sm:$0x1] %vm2002, %v2040
    %2043 = vst.msk [vmem:[#allocation3 + $0x2] sm:$0x1] %vm1956, %v1952
    %v2046 = vunpack.c.l.s4 1966171168
    %v2047 = vunpack.c.0.s8 %v2046
    %v2048 = vlaneseq
    %v2049 = vshrl.u32 %v2048, 7
    %v2050 = vsub.s32 %v2047, %v2049
    %v2051 = vrot.slane %v1952, %v2050
    %v2052 = vcombine.high %v2051, %v2051
    %v2054 = vunpack.c.l.s4 1966171168
    %v2055 = vunpack.c.0.s8 %v2054
    %v2056 = vlaneseq
    %v2057 = vshrl.u32 %v2056, 7
    %v2058 = vsub.s32 %v2055, %v2057
    %v2059 = vrot.slane %v2051, %v2058
    %v2061 = vunpack.c.l.s4 1966171168
    %v2062 = vunpack.c.0.s8 %v2061
    %v2063 = vlaneseq
    %v2064 = vshrl.u32 %v2063, 7
    %v2065 = vsub.s32 %v2062, %v2064
    %v2066 = vrot.slane %v2052, %v2065
    %2067 = vrot.lane.b32.xlu0 %v2066, 32
    %v2068 = vpop.permute.xlu0 %2067
    %2070 = vst.msk [vmem:[#allocation3 + $0x2] sm:$0x1] %vm1986, %v2068
    %v2071 = vcombine.high %v2059, %v2059
    %2072 = vrot.lane.b32.xlu0 %v2071, 64
    %v2073 = vpop.permute.xlu0 %2072
    %2075 = vst.msk [vmem:[#allocation3 + $0x2] sm:$0x1] %vm1994, %v2073
    %v2076 = vcombine.high %v2066, %v2066
    %2077 = vrot.lane.b32.xlu0 %v2076, 96
    %v2078 = vpop.permute.xlu0 %2077
    %2080 = vst.msk [vmem:[#allocation3 + $0x2] sm:$0x1] %vm2002, %v2078
    %v2081 = vld [vmem:[#allocation3] sm:$0x7]
    %v2082 = vld [vmem:[%s8] sm:$0xff]
    %v2083 = vld [vmem:[%s8 + $0x8] sm:$0xff]
    %v2084 = vld [vmem:[%s8 + $0x10] sm:$0xff]
    %v2085 = vld [vmem:[%s8 + $0x18] sm:$0xff]
    %v2086 = vld [vmem:[%s8 + $0x20] sm:$0xff]
    %v2087 = vld [vmem:[%s8 + $0x28] sm:$0xff]
    %v2088 = vld [vmem:[%s8 + $0x30] sm:$0xff]
    %v2089 = vld [vmem:[%s8 + $0x38] sm:$0xff]
    %v2090 = vld [vmem:[%s8 + $0x40] sm:$0xff]
    %v2091 = vld [vmem:[%s8 + $0x48] sm:$0xff]
    %v2092 = vld [vmem:[%s8 + $0x50] sm:$0xff]
    %v2093 = vld [vmem:[%s8 + $0x58] sm:$0xff]
    %v2094 = vld [vmem:[%s8 + $0x60] sm:$0xff]
    %v2095 = vld [vmem:[%s8 + $0x68] sm:$0xff]
    %v2096 = vld [vmem:[%s8 + $0x70] sm:$0xff]
    %v2097 = vld [vmem:[%s8 + $0x78] sm:$0xff]
    %v2098 = vld [vmem:[%s8 + $0x80] sm:$0xff]
    %v2099 = vld [vmem:[%s8 + $0x88] sm:$0xff]
    %v2100 = vld [vmem:[%s8 + $0x90] sm:$0xff]
    %v2101 = vld [vmem:[%s8 + $0x98] sm:$0xff]
    %v2102 = vld [vmem:[%s8 + $0xa0] sm:$0xff]
    %v2103 = vld [vmem:[%s8 + $0xa8] sm:$0xff]
    %v2104 = vld [vmem:[%s8 + $0xb0] sm:$0xff]
    %v2105 = vld [vmem:[%s8 + $0xb8] sm:$0xff]
    %v2106 = vld [vmem:[%s8 + $0xc0] sm:$0xff]
    %v2107 = vld [vmem:[%s8 + $0xc8] sm:$0xff]
    %v2108 = vld [vmem:[%s8 + $0xd0] sm:$0xff]
    %v2109 = vld [vmem:[%s8 + $0xd8] sm:$0xff]
    %v2110 = vld [vmem:[%s8 + $0xe0] sm:$0xff]
    %v2111 = vld [vmem:[%s8 + $0xe8] sm:$0xff]
    %v2112 = vld [vmem:[%s8 + $0xf0] sm:$0xff]
    %v2113 = vld [vmem:[%s8 + $0xf8] sm:$0xff]
    %v2114 = vld [vmem:[%s8 + $0x100] sm:$0xff]
    %v2115 = vld [vmem:[%s8 + $0x108] sm:$0xff]
    %v2116 = vld [vmem:[%s8 + $0x110] sm:$0xff]
    %v2117 = vld [vmem:[%s8 + $0x118] sm:$0xff]
    %v2118 = vld [vmem:[%s8 + $0x120] sm:$0xff]
    %v2119 = vld [vmem:[%s8 + $0x128] sm:$0xff]
    %v2120 = vld [vmem:[%s8 + $0x130] sm:$0xff]
    %v2121 = vld [vmem:[%s8 + $0x138] sm:$0xff]
    %v2122 = vld [vmem:[%s8 + $0x140] sm:$0xff]
    %v2123 = vld [vmem:[%s8 + $0x148] sm:$0xff]
    %v2124 = vld [vmem:[%s8 + $0x150] sm:$0xff]
    %v2125 = vld [vmem:[%s8 + $0x158] sm:$0xff]
    %v2126 = vld [vmem:[%s8 + $0x160] sm:$0xff]
    %v2127 = vld [vmem:[%s8 + $0x168] sm:$0xff]
    %v2128 = vld [vmem:[%s8 + $0x170] sm:$0xff]
    %v2129 = vld [vmem:[%s8 + $0x178] sm:$0xff]
    %v2130 = vld [vmem:[%s8 + $0x180] sm:$0xff]
    %v2131 = vld [vmem:[%s8 + $0x188] sm:$0xff]
    %v2132 = vld [vmem:[%s8 + $0x190] sm:$0xff]
    %v2133 = vld [vmem:[%s8 + $0x198] sm:$0xff]
    %v2134 = vld [vmem:[%s8 + $0x1a0] sm:$0xff]
    %v2135 = vld [vmem:[%s8 + $0x1a8] sm:$0xff]
    %v2136 = vld [vmem:[%s8 + $0x1b0] sm:$0xff]
    %v2137 = vld [vmem:[%s8 + $0x1b8] sm:$0xff]
    %v2138 = vld [vmem:[%s8 + $0x1c0] sm:$0xff]
    %v2139 = vld [vmem:[%s8 + $0x1c8] sm:$0xff]
    %v2140 = vld [vmem:[%s8 + $0x1d0] sm:$0xff]
    %v2141 = vld [vmem:[%s8 + $0x1d8] sm:$0xff]
    %v2142 = vld [vmem:[%s8 + $0x1e0] sm:$0xff]
    %v2143 = vld [vmem:[%s8 + $0x1e8] sm:$0xff]
    %v2144 = vld [vmem:[%s8 + $0x1f0] sm:$0xff]
    %v2145 = vld [vmem:[%s8 + $0x1f8] sm:$0xff]
    %v2146 = vld [vmem:[%s8 + $0x200] sm:$0xff]
    %v2147 = vld [vmem:[%s8 + $0x208] sm:$0xff]
    %v2148 = vld [vmem:[%s8 + $0x210] sm:$0xff]
    %v2149 = vld [vmem:[%s8 + $0x218] sm:$0xff]
    %v2150 = vld [vmem:[%s8 + $0x220] sm:$0xff]
    %v2151 = vld [vmem:[%s8 + $0x228] sm:$0xff]
    %v2152 = vld [vmem:[%s8 + $0x230] sm:$0xff]
    %v2153 = vld [vmem:[%s8 + $0x238] sm:$0xff]
    %v2154 = vld [vmem:[%s8 + $0x240] sm:$0xff]
    %v2155 = vld [vmem:[%s8 + $0x248] sm:$0xff]
    %v2156 = vld [vmem:[%s8 + $0x250] sm:$0xff]
    %v2157 = vld [vmem:[%s8 + $0x258] sm:$0xff]
    %v2158 = vld [vmem:[%s8 + $0x260] sm:$0xff]
    %v2159 = vld [vmem:[%s8 + $0x268] sm:$0xff]
    %v2160 = vld [vmem:[%s8 + $0x270] sm:$0xff]
    %v2161 = vld [vmem:[%s8 + $0x278] sm:$0xff]
    %v2162 = vld [vmem:[%s8 + $0x280] sm:$0xff]
    %v2163 = vld [vmem:[%s8 + $0x288] sm:$0xff]
    %v2164 = vld [vmem:[%s8 + $0x290] sm:$0xff]
    %v2165 = vld [vmem:[%s8 + $0x298] sm:$0xff]
    %v2166 = vld [vmem:[%s8 + $0x2a0] sm:$0xff]
    %v2167 = vld [vmem:[%s8 + $0x2a8] sm:$0xff]
    %v2168 = vld [vmem:[%s8 + $0x2b0] sm:$0xff]
    %v2169 = vld [vmem:[%s8 + $0x2b8] sm:$0xff]
    %v2170 = vld [vmem:[%s8 + $0x2c0] sm:$0xff]
    %v2171 = vld [vmem:[%s8 + $0x2c8] sm:$0xff]
    %v2172 = vld [vmem:[%s8 + $0x2d0] sm:$0xff]
    %v2173 = vld [vmem:[%s8 + $0x2d8] sm:$0xff]
    %v2174 = vld [vmem:[%s8 + $0x2e0] sm:$0xff]
    %v2175 = vld [vmem:[%s8 + $0x2e8] sm:$0xff]
    %v2176 = vld [vmem:[%s8 + $0x2f0] sm:$0xff]
    %v2177 = vld [vmem:[%s8 + $0x2f8] sm:$0xff]
    %v2178 = vld [vmem:[%s9] sm:$0x3]
    %v2180 = vlaneseq
    %v2181 = vshrl.u32 %v2180, 7
    %v2182 = vsub.s32 0, %v2181
    %v2183 = vrot.slane %v2081, %v2182
    %v2184 = vlaneseq
    %v2185 = vshrl.u32 %v2184, 7
    %v2186 = vsub.s32 1, %v2185
    %v2187 = vrot.slane %v2081, %v2186
    %v2188 = vlaneseq
    %v2189 = vshrl.u32 %v2188, 7
    %v2190 = vsub.s32 2, %v2189
    %v2191 = vrot.slane %v2081, %v2190
    %v2196 = vlaneseq
    %v2197 = vshrl.u32 %v2196, 7
    %v2198 = vsub.s32 0, %v2197
    %v2199 = vrot.slane %v2178, %v2198
    %v2200 = vlaneseq
    %v2201 = vshrl.u32 %v2200, 7
    %v2202 = vsub.s32 1, %v2201
    %v2203 = vrot.slane %v2178, %v2202
    %2206 = vmatprep.subr.mxu0 %v2083
    %2207 = vmatpush1.msra.mxu0 %v2082
    %2208 = vmatprep.subr.mxu0 %v2085
    %2209 = vmatpush1.msra.mxu0 %v2084
    %2210 = vmatprep.subr.mxu0 %v2087
    %2211 = vmatpush1.msra.mxu0 %v2086
    %2212 = vmatprep.subr.mxu0 %v2089
    %2213 = vmatpush1.msra.mxu0 %v2088
    %2214 = vmatprep.subr.mxu0 %v2091
    %2215 = vmatpush1.msra.mxu0 %v2090
    %2216 = vmatprep.subr.mxu0 %v2093
    %2217 = vmatpush1.msra.mxu0 %v2092
    %2218 = vmatprep.subr.mxu0 %v2095
    %2219 = vmatpush1.msra.mxu0 %v2094
    %2220 = vmatprep.subr.mxu0 %v2097
    %2221 = vmatpush1.msra.mxu0 %v2096
    %2222 = vmatprep.subr.mxu0 %v2099
    %2223 = vmatpush1.msra.mxu0 %v2098
    %2224 = vmatprep.subr.mxu0 %v2101
    %2225 = vmatpush1.msra.mxu0 %v2100
    %2226 = vmatprep.subr.mxu0 %v2103
    %2227 = vmatpush1.msra.mxu0 %v2102
    %2228 = vmatprep.subr.mxu0 %v2105
    %2229 = vmatpush1.msra.mxu0 %v2104
    %2230 = vmatprep.subr.mxu0 %v2107
    %2231 = vmatpush1.msra.mxu0 %v2106
    %2232 = vmatprep.subr.mxu0 %v2109
    %2233 = vmatpush1.msra.mxu0 %v2108
    %2234 = vmatprep.subr.mxu0 %v2111
    %2235 = vmatpush1.msra.mxu0 %v2110
    %2236 = vmatprep.subr.mxu0 %v2113
    %2237 = vmatpush1.msra.mxu0 %v2112
    %2238 = vmatprep.subr.mxu0 %v2115
    %2239 = vmatpush1.msra.mxu0 %v2114
    %2240 = vmatprep.subr.mxu0 %v2117
    %2241 = vmatpush1.msra.mxu0 %v2116
    %2242 = vmatprep.subr.mxu0 %v2119
    %2243 = vmatpush1.msra.mxu0 %v2118
    %2244 = vmatprep.subr.mxu0 %v2121
    %2245 = vmatpush1.msra.mxu0 %v2120
    %2246 = vmatprep.subr.mxu0 %v2123
    %2247 = vmatpush1.msra.mxu0 %v2122
    %2248 = vmatprep.subr.mxu0 %v2125
    %2249 = vmatpush1.msra.mxu0 %v2124
    %2250 = vmatprep.subr.mxu0 %v2127
    %2251 = vmatpush1.msra.mxu0 %v2126
    %2252 = vmatprep.subr.mxu0 %v2129
    %2253 = vmatpush1.msra.mxu0 %v2128
    %2254 = vmatprep.subr.mxu0 %v2131
    %2255 = vmatpush1.msra.mxu0 %v2130
    %2256 = vmatprep.subr.mxu0 %v2133
    %2257 = vmatpush1.msra.mxu0 %v2132
    %2258 = vmatprep.subr.mxu0 %v2135
    %2259 = vmatpush1.msra.mxu0 %v2134
    %2260 = vmatprep.subr.mxu0 %v2137
    %2261 = vmatpush1.msra.mxu0 %v2136
    %2262 = vmatprep.subr.mxu0 %v2139
    %2263 = vmatpush1.msra.mxu0 %v2138
    %2264 = vmatprep.subr.mxu0 %v2141
    %2265 = vmatpush1.msra.mxu0 %v2140
    %2266 = vmatprep.subr.mxu0 %v2143
    %2267 = vmatpush1.msra.mxu0 %v2142
    %2268 = vmatprep.subr.mxu0 %v2145
    %2269 = vmatpush1.msra.mxu0 %v2144
    %2270 = vmatprep.mubr.f32.mxu0 %v2187
    %2271 = vmatmul.mubr.f32.gmra.mrb[0].mxu0 %v2183
    %v2272 = vpop.f32.mrb[0].mxu0
    %v2273 = vadd.f32 %v2199, %v2272
    %v2274 = vpop.f32.mrb[0].mxu0
    %v2275 = vadd.f32 %v2203, %v2274
    %2276 = vdwg.mxu0
    %2277 = vmatprep.subr.mxu0 %v2147
    %2278 = vmatpush1.msra.mxu0 %v2146
    %2279 = vmatprep.subr.mxu0 %v2149
    %2280 = vmatpush1.msra.mxu0 %v2148
    %2281 = vmatprep.subr.mxu0 %v2151
    %2282 = vmatpush1.msra.mxu0 %v2150
    %2283 = vmatprep.subr.mxu0 %v2153
    %2284 = vmatpush1.msra.mxu0 %v2152
    %2285 = vmatprep.subr.mxu0 %v2155
    %2286 = vmatpush1.msra.mxu0 %v2154
    %2287 = vmatprep.subr.mxu0 %v2157
    %2288 = vmatpush1.msra.mxu0 %v2156
    %2289 = vmatprep.subr.mxu0 %v2159
    %2290 = vmatpush1.msra.mxu0 %v2158
    %2291 = vmatprep.subr.mxu0 %v2161
    %2292 = vmatpush1.msra.mxu0 %v2160
    %2293 = vmatprep.subr.mxu0 %v2163
    %2294 = vmatpush1.msra.mxu0 %v2162
    %2295 = vmatprep.subr.mxu0 %v2165
    %2296 = vmatpush1.msra.mxu0 %v2164
    %2297 = vmatprep.subr.mxu0 %v2167
    %2298 = vmatpush1.msra.mxu0 %v2166
    %2299 = vmatprep.subr.mxu0 %v2169
    %2300 = vmatpush1.msra.mxu0 %v2168
    %2301 = vmatprep.subr.mxu0 %v2171
    %2302 = vmatpush1.msra.mxu0 %v2170
    %2303 = vmatprep.subr.mxu0 %v2173
    %2304 = vmatpush1.msra.mxu0 %v2172
    %2305 = vmatprep.subr.mxu0 %v2175
    %2306 = vmatpush1.msra.mxu0 %v2174
    %2307 = vmatprep.subr.mxu0 %v2177
    %2308 = vmatpush1.msra.mxu0 %v2176
    %2309 = vmatprep.subr.mxu0 0.0
    %2310 = vmatpush1.msra.mxu0 0.0
    %2311 = vmatprep.subr.mxu0 0.0
    %2312 = vmatpush1.msra.mxu0 0.0
    %2313 = vmatprep.subr.mxu0 0.0
    %2314 = vmatpush1.msra.mxu0 0.0
    %2315 = vmatprep.subr.mxu0 0.0
    %2316 = vmatpush1.msra.mxu0 0.0
    %2317 = vmatprep.subr.mxu0 0.0
    %2318 = vmatpush1.msra.mxu0 0.0
    %2319 = vmatprep.subr.mxu0 0.0
    %2320 = vmatpush1.msra.mxu0 0.0
    %2321 = vmatprep.subr.mxu0 0.0
    %2322 = vmatpush1.msra.mxu0 0.0
    %2323 = vmatprep.subr.mxu0 0.0
    %2324 = vmatpush1.msra.mxu0 0.0
    %2325 = vmatprep.subr.mxu0 0.0
    %2326 = vmatpush1.msra.mxu0 0.0
    %2327 = vmatprep.subr.mxu0 0.0
    %2328 = vmatpush1.msra.mxu0 0.0
    %2329 = vmatprep.subr.mxu0 0.0
    %2330 = vmatpush1.msra.mxu0 0.0
    %2331 = vmatprep.subr.mxu0 0.0
    %2332 = vmatpush1.msra.mxu0 0.0
    %2333 = vmatprep.subr.mxu0 0.0
    %2334 = vmatpush1.msra.mxu0 0.0
    %2335 = vmatprep.subr.mxu0 0.0
    %2336 = vmatpush1.msra.mxu0 0.0
    %2337 = vmatprep.subr.mxu0 0.0
    %2338 = vmatpush1.msra.mxu0 0.0
    %2339 = vmatprep.subr.mxu0 0.0
    %2340 = vmatpush1.msra.mxu0 0.0
    %2341 = vmatprep.mubr.f32.mxu0 0.0
    %2342 = vmatmul.mubr.f32.gmra.mrb[0].mxu0 %v2191
    %v2343 = vpop.f32.mrb[0].mxu0
    %v2344 = vadd.f32 %v2273, %v2343
    %v2345 = vpop.f32.mrb[0].mxu0
    %v2346 = vadd.f32 %v2275, %v2345
    %2347 = vdwg.mxu0
    %v2350 = vcombine.low %v2344, %v2346
    %v2352 = vunpack.c.l.s4 1966171168
    %v2353 = vunpack.c.0.s8 %v2352
    %v2354 = vlaneseq
    %v2355 = vshrl.u32 %v2354, 7
    %v2356 = vsub.s32 %v2353, %v2355
    %v2357 = vrot.slane %v2350, %v2356
    %v2359 = vunpack.c.l.s4 1966171168
    %v2360 = vunpack.c.0.s8 %v2359
    %v2361 = vlaneseq
    %v2362 = vshrl.u32 %v2361, 7
    %v2363 = vsub.s32 %v2360, %v2362
    %v2364 = vrot.slane %v2357, %v2363
    %vm2366 = vcmp.lt.s32.totalorder %v1953, 144
    %vm2367 = vmand %vm1954, %vm2366
    %2368 = vst.msk [vmem:[%s12] sm:$0x3] %vm2367, %v2364
    %v2369 = vld [vmem:[%s10] sm:$0xff]
    %v2370 = vld [vmem:[%s10 + $0x8] sm:$0xf]
    %2373 = vrot.lane.b32.xlu0 %v2369, 24
    %v2374 = vpop.permute.xlu0 %2373
    %2375 = vrot.lane.b32.xlu0 %v2370, 24
    %v2376 = vpop.permute.xlu0 %2375
    %v2379 = vmul.f32 %v1951, %v2374
    %v2380 = vmul.f32 %v1952, %v2376
    %vm2381 = vcmask 203968
    %v2382 = vsel %vm2381, %v2379, 0.0
    %vm2383 = vcmask 199872
    %v2384 = vsel %vm2383, %v2380, 0.0
    %v2385 = vadd.f32 %v2382, %v2384
    %v2386 = vrot.slane %v2385, 4
    %v2387 = vadd.f32 %v2385, %v2386
    %v2388 = vrot.slane %v2387, 2
    %v2389 = vadd.f32 %v2387, %v2388
    %v2390 = vrot.slane %v2389, 1
    %v2391 = vadd.f32 %v2389, %v2390
    %v2392 = vld [vmem:[#allocation4] sm:$0x1]
    %v2394 = vlaneseq
    %v2395 = vshrl.u32 %v2394, 7
    %v2396 = vsub.s32 0, %v2395
    %v2397 = vrot.slane %v2392, %v2396
    %2398 = vrot.lane.b32.xlu0 %v2397, 24
    %v2399 = vpop.permute.xlu0 %2398
    %v2401 = vadd.f32 %v2391, %v2399
    %v2402 = vtanh.pop %v2401
    %2404 = vrot.lane.b32.xlu0 %v2402, 104
    %v2405 = vpop.permute.xlu0 %2404
    %vm2407 = vcmask 0
    %2408 = vst.msk [vmem:[#allocation5] sm:$0x1] %vm2407, %v2405
    // Predicated region
    $region50: #{forward.1} parent=1 // pred_check
      _
    $region51: #{forward.1} parent=1 // pred_check_branch
      %2410 = sbr.rel (0) target = $region53
    $region52: #{forward.1} parent=1 // pred_region
      _
    $region53: #{forward.1} parent=1 // pred_fallthru
      _
    // Predicated region
    $region54: #{forward.1} parent=1 // pred_check
      _
    $region55: #{forward.1} parent=1 // pred_check_branch
      %2412 = sbr.rel (0) target = $region57
    $region56: #{forward.1} parent=1 // pred_region
      %s2414 = ssub.s32 16, 16
      %2415 = vsyncadd [#allocation6], %s2414
      %s2417 = sshll.u32 [#allocation5], 4
      %s2418 = int_to_ptr.vmem [resolvable:$true] %s2417
      %2420 = dma.vmem_to_hbm [thread:$0]  %s2418, 16, %s13, [#allocation6]
    $region57: #{forward.1} parent=1 // pred_fallthru
      _
    // Predicated region
    $region58: #{forward.1} parent=1 // pred_check
      _
    $region59: #{forward.1} parent=1 // pred_check_branch
      %2422 = sbr.rel (0) target = $region61
    $region60: #{forward.1} parent=1 // pred_region
      _
    $region61: #{forward.1} parent=1 // pred_fallthru
      _
    // Predicated region
    $region62: #{forward.1} parent=1 // pred_check
      _
    $region63: #{forward.1} parent=1 // pred_check_branch
      %2424 = sbr.rel (0) target = $region65
    $region64: #{forward.1} parent=1 // pred_region
      %2425 = dma.done [#allocation6], 16
    $region65: #{forward.1} parent=1 // pred_fallthru
      _
    %2426 = vsyncpa [#allocation6], 1

</llo_original>
